<compile_context>
chip_gen: v5e
topology: v5e:2x2
jax: 0.10.0
libtpu: 0.0.40
codegen_flags: <defaults>
</compile_context>

<pallas_src>
import jax
import jax.numpy as jnp
from jax.experimental import pallas as pl
from jax.experimental.pallas import tpu as pltpu


def contrastive_kernel(x_ref, wf_ref, b1_ref, w2_ref, b2_ref, o_ref, acc_ref):
    k = pl.program_id(1)

    @pl.when(k == 0)
    def _():
        acc_ref[...] = jnp.zeros_like(acc_ref)

    # Fused (encoder stand-in + head Linear #1) partial product:
    # bf16 operands on the MXU, f32 accumulation in VMEM scratch.
    acc_ref[...] += jnp.dot(x_ref[...], wf_ref[...],
                            preferred_element_type=jnp.float32)

    @pl.when(k == pl.num_programs(1) - 1)
    def _():
        # Bias + ReLU epilogue in f32 (VPU).
        h = jnp.maximum(acc_ref[...] + b1_ref[...], 0.0)

        # Head Linear #2 (bf16 operands, f32 accumulation).
        z = jnp.dot(h.astype(jnp.bfloat16), w2_ref[...],
                    preferred_element_type=jnp.float32) + b2_ref[...]

        # F.normalize(z, dim=1): z / max(||z||, 1e-12) == z * rsqrt(max(sum(z^2), 1e-24)).
        ss = jnp.sum(z * z, axis=1, keepdims=True)
        o_ref[...] = (z * jax.lax.rsqrt(jnp.maximum(ss, 1e-24))).astype(o_ref.dtype)


def _round_up(x, m):
    return (x + m - 1) // m * m


def prepare_contrastive_params(w_enc, w1, b1, w2, b2):
    """One-time parameter preparation (hoisted out of the per-call path).

    Fuses the single-matmul encoder stand-in into head Linear #1 in f32
    (rounded to bf16 once), and pre-casts / pre-reshapes the remaining params.
    """
    dim_in = w1.shape[0]
    feat_dim = w2.shape[1]
    w_fused = jnp.dot(w_enc.astype(jnp.float32), w1.astype(jnp.float32))  # [D0, dim_in]
    return dict(
        w_fused=w_fused.astype(jnp.bfloat16),
        b1=b1.reshape(1, dim_in).astype(jnp.float32),
        w2=w2.astype(jnp.bfloat16),
        b2=b2.reshape(1, feat_dim).astype(jnp.float32),
    )


def _pick_tk(d0, tk_max):
    """Largest multiple-of-128 divisor of D0 that is <= tk_max (so partial K
    blocks never feed garbage into the accumulator); falls back to full D0."""
    if d0 <= tk_max or d0 % 128 != 0:
        return d0
    for cand in range(tk_max - (tk_max % 128), 127, -128):
        if d0 % cand == 0:
            return cand
    return d0


def _vmem_bytes(tm, tk, dim_in, feat_dim):
    b = 2 * tm * tk * 2               # x tiles, double-buffered, bf16
    b += 2 * tk * dim_in * 2          # w_fused tiles, double-buffered, bf16
    b += 2 * dim_in * feat_dim * 2    # w2 (resident, conservatively x2), bf16
    b += 2 * (dim_in + feat_dim) * 4  # biases, f32
    b += 2 * tm * feat_dim * 4        # out tiles, double-buffered, f32
    b += tm * dim_in * 4              # f32 accumulator scratch
    b += 2 * tm * dim_in * 4          # headroom for h / z intermediates
    return b


def contrastive_forward(x_nchw, params, *, tm=512, tk_max=2048):
    B = x_nchw.shape[0]
    D0 = x_nchw.shape[1] * x_nchw.shape[2] * x_nchw.shape[3]
    w_fused = params["w_fused"]
    b1_2d = params["b1"]
    w2_b = params["w2"]
    b2_2d = params["b2"]
    dim_in = w_fused.shape[1]
    feat_dim = w2_b.shape[1]

    # bf16 activations for the MXU; accumulation / epilogue stays f32 in-kernel.
    x_flat = x_nchw.reshape(B, D0).astype(jnp.bfloat16)

    # Pad the batch only to a multiple of 8 sublanes (cheap; no tm-multiple pad).
    b8 = _round_up(B, 8)
    if b8 != B:
        x_flat = jnp.pad(x_flat, ((0, b8 - B), (0, 0)))

    # Batch tiling: tm a multiple of 8, clamped to the padded batch. Reshape the
    # grid to an even tile count >= 2 when possible so both v7x TensorCores
    # (parallel batch axis) get work.
    tm = max(8, min(_round_up(tm, 8), b8))
    b_tiles = pl.cdiv(b8, tm)
    if b8 > 8 and b_tiles % 2 == 1:
        target = b_tiles + 1
        tm = max(8, _round_up(-(-b8 // target), 8))
        b_tiles = pl.cdiv(b8, tm)

    # K tiling over D0 (degenerates to one K step for small D0).
    tk = _pick_tk(D0, tk_max)
    k_tiles = D0 // tk

    vmem_bytes = int(min(max(int(1.5 * _vmem_bytes(tm, tk, dim_in, feat_dim)),
                             16 << 20), 48 << 20))

    out = pl.pallas_call(
        contrastive_kernel,
        out_shape=jax.ShapeDtypeStruct((b8, feat_dim), jnp.float32),
        grid_spec=pltpu.PrefetchScalarGridSpec(
            num_scalar_prefetch=0,
            grid=(b_tiles, k_tiles),
            in_specs=[
                pl.BlockSpec((tm, tk), lambda i, k: (i, k)),            # streamed activations
                pl.BlockSpec((tk, dim_in), lambda i, k: (k, 0)),        # K-streamed fused weight
                pl.BlockSpec((1, dim_in), lambda i, k: (0, 0)),         # resident bias 1
                pl.BlockSpec((dim_in, feat_dim), lambda i, k: (0, 0)),  # resident W2
                pl.BlockSpec((1, feat_dim), lambda i, k: (0, 0)),       # resident bias 2
            ],
            out_specs=pl.BlockSpec((tm, feat_dim), lambda i, k: (i, 0)),
            scratch_shapes=[pltpu.VMEM((tm, dim_in), jnp.float32)],
        ),
        compiler_params=pltpu.CompilerParams(
            dimension_semantics=("parallel", "arbitrary"),
            vmem_limit_bytes=vmem_bytes,
        ),
    )(x_flat, w_fused, b1_2d, w2_b, b2_2d)

    return out[:B]


def contrastive_ref(x_nchw, w_enc, w1, b1, w2, b2):
    """Pure-JAX f32 reference mirroring the PyTorch forward."""
    B = x_nchw.shape[0]
    x = x_nchw.reshape(B, -1).astype(jnp.float32)
    feat = x @ w_enc
    h = jnp.maximum(feat @ w1 + b1, 0.0)
    z = h @ w2 + b2
    n = jnp.sqrt(jnp.sum(z * z, axis=1, keepdims=True))
    return z / jnp.maximum(n, 1e-12)


if __name__ == "__main__":
    # Small, module-consistent shapes: name='resnet18' => dim_in=512, feat_dim=128.
    B, C, H, W = 2, 3, 16, 16
    dim_in, feat_dim = 512, 128
    D0 = C * H * W

    key = jax.random.PRNGKey(0)
    k_x, k_we, k_w1, k_b1, k_w2, k_b2 = jax.random.split(key, 6)

    x = jax.random.normal(k_x, (B, C, H, W), dtype=jnp.float32)

    # Deterministic parameter init (PyTorch-Linear-like uniform scaling).
    w_enc = jax.random.uniform(k_we, (D0, dim_in), jnp.float32, -1.0, 1.0) / jnp.sqrt(D0)
    w1 = jax.random.uniform(k_w1, (dim_in, dim_in), jnp.float32, -1.0, 1.0) / jnp.sqrt(dim_in)
    b1 = jax.random.uniform(k_b1, (dim_in,), jnp.float32, -1.0, 1.0) / jnp.sqrt(dim_in)
    w2 = jax.random.uniform(k_w2, (dim_in, feat_dim), jnp.float32, -1.0, 1.0) / jnp.sqrt(dim_in)
    b2 = jax.random.uniform(k_b2, (feat_dim,), jnp.float32, -1.0, 1.0) / jnp.sqrt(dim_in)

    # One-time fusion/cast of the parameters (hoisted out of the per-call path),
    # then a jitted forward closing over them (lets XLA treat them as constants).
    params = prepare_contrastive_params(w_enc, w1, b1, w2, b2)
    fwd = jax.jit(lambda xb: contrastive_forward(xb, params))

    out = jax.block_until_ready(fwd(x))

    ref = contrastive_ref(x, w_enc, w1, b1, w2, b2)

    # Sanity: shape, unit-norm rows (F.normalize semantics), match to f32 reference
    # within bf16-matmul tolerance.
    assert out.shape == (B, feat_dim)
    norms = jnp.linalg.norm(out, axis=1)
    assert bool(jnp.all(jnp.abs(norms - 1.0) < 1e-3))
    assert bool(jnp.max(jnp.abs(out - ref)) < 3e-2)

    print("KERNEL_OK")
</pallas_src>

<mosaic_0001>
module attributes {stable_mosaic.version = 11 : i64} {
  func.func @contrastive_kernel(%arg0: i32, %arg1: i32, %arg2: memref<8x768xbf16, #tpu.memory_space<vmem>>, %arg3: memref<768x512xbf16, #tpu.memory_space<vmem>>, %arg4: memref<1x512xf32, #tpu.memory_space<vmem>>, %arg5: memref<512x128xbf16, #tpu.memory_space<vmem>>, %arg6: memref<1x128xf32, #tpu.memory_space<vmem>>, %arg7: memref<8x128xf32, #tpu.memory_space<vmem>>, %arg8: memref<8x512xf32, #tpu.memory_space<vmem>>) attributes {dimension_semantics = [#tpu.dimension_semantics<parallel>, #tpu.dimension_semantics<arbitrary>], iteration_bounds = array<i64: 1, 1>, scalar_prefetch = 0 : i64, scratch_operands = 1 : i64, tpu.core_type = #tpu.core_type<tc>, window_params = [{transform_indices = @transform_0, window_bounds = array<i64: 8, 768>}, {transform_indices = @transform_1, window_bounds = array<i64: 768, 512>}, {pipeline_mode = #tpu.pipeline_mode<synchronous>, transform_indices = @transform_2, window_bounds = array<i64: 1, 512>}, {pipeline_mode = #tpu.pipeline_mode<synchronous>, transform_indices = @transform_3, window_bounds = array<i64: 512, 128>}, {pipeline_mode = #tpu.pipeline_mode<synchronous>, transform_indices = @transform_4, window_bounds = array<i64: 1, 128>}, {transform_indices = @transform_5, window_bounds = array<i64: 8, 128>}]} {
    %c0_i32 = arith.constant 0 : i32
    %0 = arith.cmpi eq, %arg1, %c0_i32 : i32
    %1 = arith.extui %0 : i1 to i32
    %c0_i32_0 = arith.constant 0 : i32
    %2 = arith.cmpi ne, %1, %c0_i32_0 : i32
    scf.if %2 {
      %cst_10 = arith.constant 0.000000e+00 : f32
      %12 = vector.broadcast %cst_10 : f32 to vector<8x512xf32>
      %c0_11 = arith.constant 0 : index
      %c0_12 = arith.constant 0 : index
      %13 = vector.load %arg8[%c0_11, %c0_12] : memref<8x512xf32, #tpu.memory_space<vmem>>, vector<8x512xf32>
      tpu.vector_store %arg8[%c0_11, %c0_12], %12 {strides = array<i32>} : memref<8x512xf32, #tpu.memory_space<vmem>>, vector<8x512xf32>,
    } else {
    }
    %c0 = arith.constant 0 : index
    %c0_1 = arith.constant 0 : index
    %3 = vector.load %arg8[%c0, %c0_1] : memref<8x512xf32, #tpu.memory_space<vmem>>, vector<8x512xf32>
    %c0_2 = arith.constant 0 : index
    %c0_3 = arith.constant 0 : index
    %4 = vector.load %arg2[%c0_2, %c0_3] : memref<8x768xbf16, #tpu.memory_space<vmem>>, vector<8x768xbf16>
    %c0_4 = arith.constant 0 : index
    %c0_5 = arith.constant 0 : index
    %5 = vector.load %arg3[%c0_4, %c0_5] : memref<768x512xbf16, #tpu.memory_space<vmem>>, vector<768x512xbf16>
    %cst = arith.constant dense<0.000000e+00> : vector<8x512xf32>
    %6 = tpu.matmul %4, %5, %cst {dimension_numbers = #tpu.dot_dimension_numbers<[1], [0], [0], [1], [0, 0, 1, 1], [], []>} : vector<8x768xbf16>, vector<768x512xbf16>, vector<8x512xf32> -> vector<8x512xf32>
    %7 = arith.addf %3, %6 : vector<8x512xf32>
    %c0_6 = arith.constant 0 : index
    %c0_7 = arith.constant 0 : index
    %8 = vector.load %arg8[%c0_6, %c0_7] : memref<8x512xf32, #tpu.memory_space<vmem>>, vector<8x512xf32>
    tpu.vector_store %arg8[%c0_6, %c0_7], %7 {strides = array<i32>} : memref<8x512xf32, #tpu.memory_space<vmem>>, vector<8x512xf32>,
    %c0_i32_8 = arith.constant 0 : i32
    %9 = arith.cmpi eq, %arg1, %c0_i32_8 : i32
    %10 = arith.extui %9 : i1 to i32
    %c0_i32_9 = arith.constant 0 : i32
    %11 = arith.cmpi ne, %10, %c0_i32_9 : i32
    scf.if %11 {
      %c0_10 = arith.constant 0 : index
      %c0_11 = arith.constant 0 : index
      %12 = vector.load %arg8[%c0_10, %c0_11] : memref<8x512xf32, #tpu.memory_space<vmem>>, vector<8x512xf32>
      %c0_12 = arith.constant 0 : index
      %c0_13 = arith.constant 0 : index
      %13 = vector.load %arg4[%c0_12, %c0_13] : memref<1x512xf32, #tpu.memory_space<vmem>>, vector<1x512xf32>
      %14 = vector.broadcast %13 : vector<1x512xf32> to vector<8x512xf32>
      %15 = arith.addf %12, %14 : vector<8x512xf32>
      %cst_14 = arith.constant 0.000000e+00 : f32
      %16 = vector.broadcast %cst_14 : f32 to vector<8x512xf32>
      %17 = arith.maximumf %15, %16 : vector<8x512xf32>
      %18 = arith.truncf %17 : vector<8x512xf32> to vector<8x512xbf16>
      %c0_15 = arith.constant 0 : index
      %c0_16 = arith.constant 0 : index
      %19 = vector.load %arg5[%c0_15, %c0_16] : memref<512x128xbf16, #tpu.memory_space<vmem>>, vector<512x128xbf16>
      %cst_17 = arith.constant dense<0.000000e+00> : vector<8x128xf32>
      %20 = tpu.matmul %18, %19, %cst_17 {dimension_numbers = #tpu.dot_dimension_numbers<[1], [0], [0], [1], [0, 0, 1, 1], [], []>} : vector<8x512xbf16>, vector<512x128xbf16>, vector<8x128xf32> -> vector<8x128xf32>
      %c0_18 = arith.constant 0 : index
      %c0_19 = arith.constant 0 : index
      %21 = vector.load %arg6[%c0_18, %c0_19] : memref<1x128xf32, #tpu.memory_space<vmem>>, vector<1x128xf32>
      %22 = vector.broadcast %21 : vector<1x128xf32> to vector<8x128xf32>
      %23 = arith.addf %20, %22 : vector<8x128xf32>
      %24 = arith.mulf %23, %23 : vector<8x128xf32>
      %cst_20 = arith.constant dense<0.000000e+00> : vector<8xf32>
      %25 = vector.multi_reduction <add>, %24, %cst_20 [1] : vector<8x128xf32> to vector<8xf32>
      %26 = vector.shape_cast %25 : vector<8xf32> to vector<8x1xf32>
      %cst_21 = arith.constant 1.000000e-24 : f32
      %27 = vector.broadcast %cst_21 : f32 to vector<8x1xf32>
      %28 = arith.maximumf %26, %27 : vector<8x1xf32>
      %29 = math.rsqrt %28 : vector<8x1xf32>
      %30 = vector.broadcast %29 : vector<8x1xf32> to vector<8x128xf32>
      %31 = arith.mulf %23, %30 : vector<8x128xf32>
      %c0_22 = arith.constant 0 : index
      %c0_23 = arith.constant 0 : index
      %32 = vector.load %arg7[%c0_22, %c0_23] : memref<8x128xf32, #tpu.memory_space<vmem>>, vector<8x128xf32>
      tpu.vector_store %arg7[%c0_22, %c0_23], %31 {strides = array<i32>} : memref<8x128xf32, #tpu.memory_space<vmem>>, vector<8x128xf32>,
    } else {
    }
    return
  }
  func.func @transform_0(%arg0: i32, %arg1: i32) -> (i32, i32) {
    %c0_i32 = arith.constant 0 : i32
    return %arg0, %arg1 : i32, i32
  }
  func.func @transform_1(%arg0: i32, %arg1: i32) -> (i32, i32) {
    %c0_i32 = arith.constant 0 : i32
    %c0_i32_0 = arith.constant 0 : i32
    return %arg1, %c0_i32 : i32, i32
  }
  func.func @transform_2(%arg0: i32, %arg1: i32) -> (i32, i32) {
    %c0_i32 = arith.constant 0 : i32
    %c0_i32_0 = arith.constant 0 : i32
    %c0_i32_1 = arith.constant 0 : i32
    return %c0_i32, %c0_i32_0 : i32, i32
  }
  func.func @transform_3(%arg0: i32, %arg1: i32) -> (i32, i32) {
    %c0_i32 = arith.constant 0 : i32
    %c0_i32_0 = arith.constant 0 : i32
    %c0_i32_1 = arith.constant 0 : i32
    return %c0_i32, %c0_i32_0 : i32, i32
  }
  func.func @transform_4(%arg0: i32, %arg1: i32) -> (i32, i32) {
    %c0_i32 = arith.constant 0 : i32
    %c0_i32_0 = arith.constant 0 : i32
    %c0_i32_1 = arith.constant 0 : i32
    return %c0_i32, %c0_i32_0 : i32, i32
  }
  func.func @transform_5(%arg0: i32, %arg1: i32) -> (i32, i32) {
    %c0_i32 = arith.constant 0 : i32
    %c0_i32_0 = arith.constant 0 : i32
    return %arg0, %c0_i32 : i32, i32
  }
}

</mosaic_0001>

<llo_original>
// kernel: _lambda_.1
$region0: #{_lambda_.1}
  #allocation0 [shape = 'u32[]', space=smem, size = 0x4, offset = 0x4, fixed_abs, tag = 'smem constant byte address 0x4 - core index']
  #allocation1 [shape = 'u32[72,128]{1,0:T(1,128)}', space=vmem, size = 0x9000, scoped, tag = 'internal scratch']
  #allocation2 [shape = 'f32[8,512]{1,0:T(8,128)}', space=vmem, size = 0x4000, scoped, tag = 'scratch operand']
  %s0 = inlined_call_operand.vmem [shape: bf16[8,768], index: 0, kind: input, shape index: {}]
  %s1 = inlined_call_operand.hbm [shape: bf16[768,512], index: 1, kind: input, shape index: {}]
  %s2 = inlined_call_operand.vmem [shape: f32[1,512], index: 2, kind: input, shape index: {}]
  %s3 = inlined_call_operand.hbm [shape: bf16[512,128], index: 3, kind: input, shape index: {}]
  %s4 = inlined_call_operand.vmem [shape: f32[1,128], index: 4, kind: input, shape index: {}]
  %s5 = inlined_call_operand.vmem [shape: f32[8,128], index: 5, kind: output, shape index: {}]
  %s6 = sld [smem:[#allocation0]]
  $region46: #{_lambda_.1} parent=0
    _
  %s8 = ssub.s32 1, %s6
  %s9 = scalar_select 0, %s8, %s6
  $region1: #{_lambda_.1} parent=0
    #allocation3 [shape = 'u8[786432]{0}', space=vmem, size = 0xc0000, scoped, tag = 'input window, operand 1, single buffered']
    #allocation4 [shape = 's32[1]{0}', space=sflag, size = 0x4, scoped, tag = 'scoped memory for _lambda_.1']
    #allocation5 [shape = 'u8[131072]{0}', space=vmem, size = 0x20000, scoped, tag = 'input window, operand 3, single buffered']
    #allocation6 [shape = 's32[1]{0}', space=sflag, size = 0x4, scoped, tag = 'scoped memory for _lambda_.1']
    %10 = vsyncpa [#allocation4], 0
    %11 = vsyncpa [#allocation6], 0
    // Predicated region
    $region2: #{_lambda_.1} parent=1 // pred_check
      _
    $region3: #{_lambda_.1} parent=1 // pred_check_branch
      %13 = sbr.rel (0) target = $region5
    $region4: #{_lambda_.1} parent=1 // pred_region
      _
    $region5: #{_lambda_.1} parent=1 // pred_fallthru
      _
    // Predicated region
    $region6: #{_lambda_.1} parent=1 // pred_check
      _
    $region7: #{_lambda_.1} parent=1 // pred_check_branch
      %15 = sbr.rel (0) target = $region9
    $region8: #{_lambda_.1} parent=1 // pred_region
      %17 = vsyncadd [#allocation4], 0
      %s18 = sshll.u32 %s1, 4
      %s19 = int_to_ptr.hbm [resolvable:$true] %s18
      %s20 = sshll.u32 [#allocation3], 4
      %s21 = int_to_ptr.vmem [resolvable:$true] %s20
      %26 = dma.hbm_to_vmem [thread:$0]  %s19, 24576, %s21, [#allocation4], 256, 256, 16
    $region9: #{_lambda_.1} parent=1 // pred_fallthru
      _
    // Predicated region
    $region10: #{_lambda_.1} parent=1 // pred_check
      _
    $region11: #{_lambda_.1} parent=1 // pred_check_branch
      %28 = sbr.rel (0) target = $region13
    $region12: #{_lambda_.1} parent=1 // pred_region
      _
    $region13: #{_lambda_.1} parent=1 // pred_fallthru
      _
    // Predicated region
    $region14: #{_lambda_.1} parent=1 // pred_check
      _
    $region15: #{_lambda_.1} parent=1 // pred_check_branch
      %30 = sbr.rel (0) target = $region17
    $region16: #{_lambda_.1} parent=1 // pred_region
      %32 = vsyncadd [#allocation6], 0
      %s33 = sshll.u32 %s3, 4
      %s34 = int_to_ptr.hbm [resolvable:$true] %s33
      %s35 = sshll.u32 [#allocation5], 4
      %s36 = int_to_ptr.vmem [resolvable:$true] %s35
      %41 = dma.hbm_to_vmem [thread:$0]  %s34, 4096, %s36, [#allocation6], 64, 64, 4
    $region17: #{_lambda_.1} parent=1 // pred_fallthru
      _
    // Predicated region
    $region18: #{_lambda_.1} parent=1 // pred_check
      _
    $region19: #{_lambda_.1} parent=1 // pred_check_branch
      %43 = sbr.rel (0) target = $region21
    $region20: #{_lambda_.1} parent=1 // pred_region
      _
    $region21: #{_lambda_.1} parent=1 // pred_fallthru
      _
    // Predicated region
    $region22: #{_lambda_.1} parent=1 // pred_check
      _
    $region23: #{_lambda_.1} parent=1 // pred_check_branch
      %45 = sbr.rel (0) target = $region25
    $region24: #{_lambda_.1} parent=1 // pred_region
      %47 = dma.done [#allocation4], 24576
    $region25: #{_lambda_.1} parent=1 // pred_fallthru
      _
    // Predicated region
    $region26: #{_lambda_.1} parent=1 // pred_check
      _
    $region27: #{_lambda_.1} parent=1 // pred_check_branch
      %49 = sbr.rel (0) target = $region29
    $region28: #{_lambda_.1} parent=1 // pred_region
      %51 = dma.done [#allocation6], 4096
    $region29: #{_lambda_.1} parent=1 // pred_fallthru
      _
    %p52 = scmp.eq.s32.totalorder 0, 0
    // Predicated region
    $region30: #{_lambda_.1} parent=1 // pred_check
      %p53 = pneg %p52
    $region31: #{_lambda_.1} parent=1 // pred_check_branch
      %55 = sbr.rel (%p53) target = $region33
    $region32: #{_lambda_.1} parent=1 // pred_region
      %56 = vst [vmem:[#allocation2] sm:$0xff] 0.0
      %57 = vst [vmem:[#allocation2 + $0x8] sm:$0xff] 0.0
      %58 = vst [vmem:[#allocation2 + $0x10] sm:$0xff] 0.0
      %59 = vst [vmem:[#allocation2 + $0x18] sm:$0xff] 0.0
    $region33: #{_lambda_.1} parent=1 // pred_fallthru
      _
    %v60 = vld [vmem:[#allocation2] sm:$0xff]
    %v61 = vld [vmem:[#allocation2 + $0x8] sm:$0xff]
    %v62 = vld [vmem:[#allocation2 + $0x10] sm:$0xff]
    %v63 = vld [vmem:[#allocation2 + $0x18] sm:$0xff]
    %v64 = vld [vmem:[%s0] sm:$0xff]
    %v65 = vld [vmem:[%s0 + $0x8] sm:$0xff]
    %v66 = vld [vmem:[%s0 + $0x10] sm:$0xff]
    %v67 = vld [vmem:[#allocation3] sm:$0xff]
    %v68 = vld [vmem:[#allocation3 + $0x8] sm:$0xff]
    %v69 = vld [vmem:[#allocation3 + $0x10] sm:$0xff]
    %v70 = vld [vmem:[#allocation3 + $0x18] sm:$0xff]
    %v71 = vld [vmem:[#allocation3 + $0x20] sm:$0xff]
    %v72 = vld [vmem:[#allocation3 + $0x28] sm:$0xff]
    %v73 = vld [vmem:[#allocation3 + $0x30] sm:$0xff]
    %v74 = vld [vmem:[#allocation3 + $0x38] sm:$0xff]
    %v75 = vld [vmem:[#allocation3 + $0x40] sm:$0xff]
    %v76 = vld [vmem:[#allocation3 + $0x48] sm:$0xff]
    %v77 = vld [vmem:[#allocation3 + $0x50] sm:$0xff]
    %v78 = vld [vmem:[#allocation3 + $0x58] sm:$0xff]
    %v79 = vld [vmem:[#allocation3 + $0x60] sm:$0xff]
    %v80 = vld [vmem:[#allocation3 + $0x68] sm:$0xff]
    %v81 = vld [vmem:[#allocation3 + $0x70] sm:$0xff]
    %v82 = vld [vmem:[#allocation3 + $0x78] sm:$0xff]
    %v83 = vld [vmem:[#allocation3 + $0x80] sm:$0xff]
    %v84 = vld [vmem:[#allocation3 + $0x88] sm:$0xff]
    %v85 = vld [vmem:[#allocation3 + $0x90] sm:$0xff]
    %v86 = vld [vmem:[#allocation3 + $0x98] sm:$0xff]
    %v87 = vld [vmem:[#allocation3 + $0xa0] sm:$0xff]
    %v88 = vld [vmem:[#allocation3 + $0xa8] sm:$0xff]
    %v89 = vld [vmem:[#allocation3 + $0xb0] sm:$0xff]
    %v90 = vld [vmem:[#allocation3 + $0xb8] sm:$0xff]
    %v91 = vld [vmem:[#allocation3 + $0xc0] sm:$0xff]
    %v92 = vld [vmem:[#allocation3 + $0xc8] sm:$0xff]
    %v93 = vld [vmem:[#allocation3 + $0xd0] sm:$0xff]
    %v94 = vld [vmem:[#allocation3 + $0xd8] sm:$0xff]
    %v95 = vld [vmem:[#allocation3 + $0xe0] sm:$0xff]
    %v96 = vld [vmem:[#allocation3 + $0xe8] sm:$0xff]
    %v97 = vld [vmem:[#allocation3 + $0xf0] sm:$0xff]
    %v98 = vld [vmem:[#allocation3 + $0xf8] sm:$0xff]
    %v99 = vld [vmem:[#allocation3 + $0x100] sm:$0xff]
    %v100 = vld [vmem:[#allocation3 + $0x108] sm:$0xff]
    %v101 = vld [vmem:[#allocation3 + $0x110] sm:$0xff]
    %v102 = vld [vmem:[#allocation3 + $0x118] sm:$0xff]
    %v103 = vld [vmem:[#allocation3 + $0x120] sm:$0xff]
    %v104 = vld [vmem:[#allocation3 + $0x128] sm:$0xff]
    %v105 = vld [vmem:[#allocation3 + $0x130] sm:$0xff]
    %v106 = vld [vmem:[#allocation3 + $0x138] sm:$0xff]
    %v107 = vld [vmem:[#allocation3 + $0x140] sm:$0xff]
    %v108 = vld [vmem:[#allocation3 + $0x148] sm:$0xff]
    %v109 = vld [vmem:[#allocation3 + $0x150] sm:$0xff]
    %v110 = vld [vmem:[#allocation3 + $0x158] sm:$0xff]
    %v111 = vld [vmem:[#allocation3 + $0x160] sm:$0xff]
    %v112 = vld [vmem:[#allocation3 + $0x168] sm:$0xff]
    %v113 = vld [vmem:[#allocation3 + $0x170] sm:$0xff]
    %v114 = vld [vmem:[#allocation3 + $0x178] sm:$0xff]
    %v115 = vld [vmem:[#allocation3 + $0x180] sm:$0xff]
    %v116 = vld [vmem:[#allocation3 + $0x188] sm:$0xff]
    %v117 = vld [vmem:[#allocation3 + $0x190] sm:$0xff]
    %v118 = vld [vmem:[#allocation3 + $0x198] sm:$0xff]
    %v119 = vld [vmem:[#allocation3 + $0x1a0] sm:$0xff]
    %v120 = vld [vmem:[#allocation3 + $0x1a8] sm:$0xff]
    %v121 = vld [vmem:[#allocation3 + $0x1b0] sm:$0xff]
    %v122 = vld [vmem:[#allocation3 + $0x1b8] sm:$0xff]
    %v123 = vld [vmem:[#allocation3 + $0x1c0] sm:$0xff]
    %v124 = vld [vmem:[#allocation3 + $0x1c8] sm:$0xff]
    %v125 = vld [vmem:[#allocation3 + $0x1d0] sm:$0xff]
    %v126 = vld [vmem:[#allocation3 + $0x1d8] sm:$0xff]
    %v127 = vld [vmem:[#allocation3 + $0x1e0] sm:$0xff]
    %v128 = vld [vmem:[#allocation3 + $0x1e8] sm:$0xff]
    %v129 = vld [vmem:[#allocation3 + $0x1f0] sm:$0xff]
    %v130 = vld [vmem:[#allocation3 + $0x1f8] sm:$0xff]
    %v131 = vld [vmem:[#allocation3 + $0x200] sm:$0xff]
    %v132 = vld [vmem:[#allocation3 + $0x208] sm:$0xff]
    %v133 = vld [vmem:[#allocation3 + $0x210] sm:$0xff]
    %v134 = vld [vmem:[#allocation3 + $0x218] sm:$0xff]
    %v135 = vld [vmem:[#allocation3 + $0x220] sm:$0xff]
    %v136 = vld [vmem:[#allocation3 + $0x228] sm:$0xff]
    %v137 = vld [vmem:[#allocation3 + $0x230] sm:$0xff]
    %v138 = vld [vmem:[#allocation3 + $0x238] sm:$0xff]
    %v139 = vld [vmem:[#allocation3 + $0x240] sm:$0xff]
    %v140 = vld [vmem:[#allocation3 + $0x248] sm:$0xff]
    %v141 = vld [vmem:[#allocation3 + $0x250] sm:$0xff]
    %v142 = vld [vmem:[#allocation3 + $0x258] sm:$0xff]
    %v143 = vld [vmem:[#allocation3 + $0x260] sm:$0xff]
    %v144 = vld [vmem:[#allocation3 + $0x268] sm:$0xff]
    %v145 = vld [vmem:[#allocation3 + $0x270] sm:$0xff]
    %v146 = vld [vmem:[#allocation3 + $0x278] sm:$0xff]
    %v147 = vld [vmem:[#allocation3 + $0x280] sm:$0xff]
    %v148 = vld [vmem:[#allocation3 + $0x288] sm:$0xff]
    %v149 = vld [vmem:[#allocation3 + $0x290] sm:$0xff]
    %v150 = vld [vmem:[#allocation3 + $0x298] sm:$0xff]
    %v151 = vld [vmem:[#allocation3 + $0x2a0] sm:$0xff]
    %v152 = vld [vmem:[#allocation3 + $0x2a8] sm:$0xff]
    %v153 = vld [vmem:[#allocation3 + $0x2b0] sm:$0xff]
    %v154 = vld [vmem:[#allocation3 + $0x2b8] sm:$0xff]
    %v155 = vld [vmem:[#allocation3 + $0x2c0] sm:$0xff]
    %v156 = vld [vmem:[#allocation3 + $0x2c8] sm:$0xff]
    %v157 = vld [vmem:[#allocation3 + $0x2d0] sm:$0xff]
    %v158 = vld [vmem:[#allocation3 + $0x2d8] sm:$0xff]
    %v159 = vld [vmem:[#allocation3 + $0x2e0] sm:$0xff]
    %v160 = vld [vmem:[#allocation3 + $0x2e8] sm:$0xff]
    %v161 = vld [vmem:[#allocation3 + $0x2f0] sm:$0xff]
    %v162 = vld [vmem:[#allocation3 + $0x2f8] sm:$0xff]
    %v163 = vld [vmem:[#allocation3 + $0x300] sm:$0xff]
    %v164 = vld [vmem:[#allocation3 + $0x308] sm:$0xff]
    %v165 = vld [vmem:[#allocation3 + $0x310] sm:$0xff]
    %v166 = vld [vmem:[#allocation3 + $0x318] sm:$0xff]
    %v167 = vld [vmem:[#allocation3 + $0x320] sm:$0xff]
    %v168 = vld [vmem:[#allocation3 + $0x328] sm:$0xff]
    %v169 = vld [vmem:[#allocation3 + $0x330] sm:$0xff]
    %v170 = vld [vmem:[#allocation3 + $0x338] sm:$0xff]
    %v171 = vld [vmem:[#allocation3 + $0x340] sm:$0xff]
    %v172 = vld [vmem:[#allocation3 + $0x348] sm:$0xff]
    %v173 = vld [vmem:[#allocation3 + $0x350] sm:$0xff]
    %v174 = vld [vmem:[#allocation3 + $0x358] sm:$0xff]
    %v175 = vld [vmem:[#allocation3 + $0x360] sm:$0xff]
    %v176 = vld [vmem:[#allocation3 + $0x368] sm:$0xff]
    %v177 = vld [vmem:[#allocation3 + $0x370] sm:$0xff]
    %v178 = vld [vmem:[#allocation3 + $0x378] sm:$0xff]
    %v179 = vld [vmem:[#allocation3 + $0x380] sm:$0xff]
    %v180 = vld [vmem:[#allocation3 + $0x388] sm:$0xff]
    %v181 = vld [vmem:[#allocation3 + $0x390] sm:$0xff]
    %v182 = vld [vmem:[#allocation3 + $0x398] sm:$0xff]
    %v183 = vld [vmem:[#allocation3 + $0x3a0] sm:$0xff]
    %v184 = vld [vmem:[#allocation3 + $0x3a8] sm:$0xff]
    %v185 = vld [vmem:[#allocation3 + $0x3b0] sm:$0xff]
    %v186 = vld [vmem:[#allocation3 + $0x3b8] sm:$0xff]
    %v187 = vld [vmem:[#allocation3 + $0x3c0] sm:$0xff]
    %v188 = vld [vmem:[#allocation3 + $0x3c8] sm:$0xff]
    %v189 = vld [vmem:[#allocation3 + $0x3d0] sm:$0xff]
    %v190 = vld [vmem:[#allocation3 + $0x3d8] sm:$0xff]
    %v191 = vld [vmem:[#allocation3 + $0x3e0] sm:$0xff]
    %v192 = vld [vmem:[#allocation3 + $0x3e8] sm:$0xff]
    %v193 = vld [vmem:[#allocation3 + $0x3f0] sm:$0xff]
    %v194 = vld [vmem:[#allocation3 + $0x3f8] sm:$0xff]
    %v195 = vld [vmem:[#allocation3 + $0x400] sm:$0xff]
    %v196 = vld [vmem:[#allocation3 + $0x408] sm:$0xff]
    %v197 = vld [vmem:[#allocation3 + $0x410] sm:$0xff]
    %v198 = vld [vmem:[#allocation3 + $0x418] sm:$0xff]
    %v199 = vld [vmem:[#allocation3 + $0x420] sm:$0xff]
    %v200 = vld [vmem:[#allocation3 + $0x428] sm:$0xff]
    %v201 = vld [vmem:[#allocation3 + $0x430] sm:$0xff]
    %v202 = vld [vmem:[#allocation3 + $0x438] sm:$0xff]
    %v203 = vld [vmem:[#allocation3 + $0x440] sm:$0xff]
    %v204 = vld [vmem:[#allocation3 + $0x448] sm:$0xff]
    %v205 = vld [vmem:[#allocation3 + $0x450] sm:$0xff]
    %v206 = vld [vmem:[#allocation3 + $0x458] sm:$0xff]
    %v207 = vld [vmem:[#allocation3 + $0x460] sm:$0xff]
    %v208 = vld [vmem:[#allocation3 + $0x468] sm:$0xff]
    %v209 = vld [vmem:[#allocation3 + $0x470] sm:$0xff]
    %v210 = vld [vmem:[#allocation3 + $0x478] sm:$0xff]
    %v211 = vld [vmem:[#allocation3 + $0x480] sm:$0xff]
    %v212 = vld [vmem:[#allocation3 + $0x488] sm:$0xff]
    %v213 = vld [vmem:[#allocation3 + $0x490] sm:$0xff]
    %v214 = vld [vmem:[#allocation3 + $0x498] sm:$0xff]
    %v215 = vld [vmem:[#allocation3 + $0x4a0] sm:$0xff]
    %v216 = vld [vmem:[#allocation3 + $0x4a8] sm:$0xff]
    %v217 = vld [vmem:[#allocation3 + $0x4b0] sm:$0xff]
    %v218 = vld [vmem:[#allocation3 + $0x4b8] sm:$0xff]
    %v219 = vld [vmem:[#allocation3 + $0x4c0] sm:$0xff]
    %v220 = vld [vmem:[#allocation3 + $0x4c8] sm:$0xff]
    %v221 = vld [vmem:[#allocation3 + $0x4d0] sm:$0xff]
    %v222 = vld [vmem:[#allocation3 + $0x4d8] sm:$0xff]
    %v223 = vld [vmem:[#allocation3 + $0x4e0] sm:$0xff]
    %v224 = vld [vmem:[#allocation3 + $0x4e8] sm:$0xff]
    %v225 = vld [vmem:[#allocation3 + $0x4f0] sm:$0xff]
    %v226 = vld [vmem:[#allocation3 + $0x4f8] sm:$0xff]
    %v227 = vld [vmem:[#allocation3 + $0x500] sm:$0xff]
    %v228 = vld [vmem:[#allocation3 + $0x508] sm:$0xff]
    %v229 = vld [vmem:[#allocation3 + $0x510] sm:$0xff]
    %v230 = vld [vmem:[#allocation3 + $0x518] sm:$0xff]
    %v231 = vld [vmem:[#allocation3 + $0x520] sm:$0xff]
    %v232 = vld [vmem:[#allocation3 + $0x528] sm:$0xff]
    %v233 = vld [vmem:[#allocation3 + $0x530] sm:$0xff]
    %v234 = vld [vmem:[#allocation3 + $0x538] sm:$0xff]
    %v235 = vld [vmem:[#allocation3 + $0x540] sm:$0xff]
    %v236 = vld [vmem:[#allocation3 + $0x548] sm:$0xff]
    %v237 = vld [vmem:[#allocation3 + $0x550] sm:$0xff]
    %v238 = vld [vmem:[#allocation3 + $0x558] sm:$0xff]
    %v239 = vld [vmem:[#allocation3 + $0x560] sm:$0xff]
    %v240 = vld [vmem:[#allocation3 + $0x568] sm:$0xff]
    %v241 = vld [vmem:[#allocation3 + $0x570] sm:$0xff]
    %v242 = vld [vmem:[#allocation3 + $0x578] sm:$0xff]
    %v243 = vld [vmem:[#allocation3 + $0x580] sm:$0xff]
    %v244 = vld [vmem:[#allocation3 + $0x588] sm:$0xff]
    %v245 = vld [vmem:[#allocation3 + $0x590] sm:$0xff]
    %v246 = vld [vmem:[#allocation3 + $0x598] sm:$0xff]
    %v247 = vld [vmem:[#allocation3 + $0x5a0] sm:$0xff]
    %v248 = vld [vmem:[#allocation3 + $0x5a8] sm:$0xff]
    %v249 = vld [vmem:[#allocation3 + $0x5b0] sm:$0xff]
    %v250 = vld [vmem:[#allocation3 + $0x5b8] sm:$0xff]
    %v251 = vld [vmem:[#allocation3 + $0x5c0] sm:$0xff]
    %v252 = vld [vmem:[#allocation3 + $0x5c8] sm:$0xff]
    %v253 = vld [vmem:[#allocation3 + $0x5d0] sm:$0xff]
    %v254 = vld [vmem:[#allocation3 + $0x5d8] sm:$0xff]
    %v255 = vld [vmem:[#allocation3 + $0x5e0] sm:$0xff]
    %v256 = vld [vmem:[#allocation3 + $0x5e8] sm:$0xff]
    %v257 = vld [vmem:[#allocation3 + $0x5f0] sm:$0xff]
    %v258 = vld [vmem:[#allocation3 + $0x5f8] sm:$0xff]
    %v262 = vunpack.c.l.b16 %v64
    %v263 = vunpack.c.h.b16 %v64
    %v264 = vunpack.c.l.b16 %v65
    %v265 = vunpack.c.h.b16 %v65
    %v266 = vunpack.c.l.b16 %v66
    %v267 = vunpack.c.h.b16 %v66
    %v268 = vpack.c.b16 %v262, %v262
    %v269 = vpack.c.b16 %v263, %v263
    %v270 = vpack.c.b16 %v264, %v264
    %v271 = vpack.c.b16 %v265, %v265
    %v272 = vpack.c.b16 %v266, %v266
    %v273 = vpack.c.b16 %v267, %v267
    %v472 = vunpack.c.l.b16 %v67
    %v473 = vunpack.c.h.b16 %v67
    %v474 = vunpack.c.l.b16 %v68
    %v475 = vunpack.c.h.b16 %v68
    %v476 = vunpack.c.l.b16 %v69
    %v477 = vunpack.c.h.b16 %v69
    %v478 = vunpack.c.l.b16 %v70
    %v479 = vunpack.c.h.b16 %v70
    %v480 = vunpack.c.l.b16 %v71
    %v481 = vunpack.c.h.b16 %v71
    %v482 = vunpack.c.l.b16 %v72
    %v483 = vunpack.c.h.b16 %v72
    %v484 = vunpack.c.l.b16 %v73
    %v485 = vunpack.c.h.b16 %v73
    %v486 = vunpack.c.l.b16 %v74
    %v487 = vunpack.c.h.b16 %v74
    %v488 = vunpack.c.l.b16 %v75
    %v489 = vunpack.c.h.b16 %v75
    %v490 = vunpack.c.l.b16 %v76
    %v491 = vunpack.c.h.b16 %v76
    %v492 = vunpack.c.l.b16 %v77
    %v493 = vunpack.c.h.b16 %v77
    %v494 = vunpack.c.l.b16 %v78
    %v495 = vunpack.c.h.b16 %v78
    %v496 = vunpack.c.l.b16 %v79
    %v497 = vunpack.c.h.b16 %v79
    %v498 = vunpack.c.l.b16 %v80
    %v499 = vunpack.c.h.b16 %v80
    %v500 = vunpack.c.l.b16 %v81
    %v501 = vunpack.c.h.b16 %v81
    %v502 = vunpack.c.l.b16 %v82
    %v503 = vunpack.c.h.b16 %v82
    %v504 = vunpack.c.l.b16 %v83
    %v505 = vunpack.c.h.b16 %v83
    %v506 = vunpack.c.l.b16 %v84
    %v507 = vunpack.c.h.b16 %v84
    %v508 = vunpack.c.l.b16 %v85
    %v509 = vunpack.c.h.b16 %v85
    %v510 = vunpack.c.l.b16 %v86
    %v511 = vunpack.c.h.b16 %v86
    %v512 = vunpack.c.l.b16 %v87
    %v513 = vunpack.c.h.b16 %v87
    %v514 = vunpack.c.l.b16 %v88
    %v515 = vunpack.c.h.b16 %v88
    %v516 = vunpack.c.l.b16 %v89
    %v517 = vunpack.c.h.b16 %v89
    %v518 = vunpack.c.l.b16 %v90
    %v519 = vunpack.c.h.b16 %v90
    %v520 = vunpack.c.l.b16 %v91
    %v521 = vunpack.c.h.b16 %v91
    %v522 = vunpack.c.l.b16 %v92
    %v523 = vunpack.c.h.b16 %v92
    %v524 = vunpack.c.l.b16 %v93
    %v525 = vunpack.c.h.b16 %v93
    %v526 = vunpack.c.l.b16 %v94
    %v527 = vunpack.c.h.b16 %v94
    %v528 = vunpack.c.l.b16 %v95
    %v529 = vunpack.c.h.b16 %v95
    %v530 = vunpack.c.l.b16 %v96
    %v531 = vunpack.c.h.b16 %v96
    %v532 = vunpack.c.l.b16 %v97
    %v533 = vunpack.c.h.b16 %v97
    %v534 = vunpack.c.l.b16 %v98
    %v535 = vunpack.c.h.b16 %v98
    %v536 = vunpack.c.l.b16 %v99
    %v537 = vunpack.c.h.b16 %v99
    %v538 = vunpack.c.l.b16 %v100
    %v539 = vunpack.c.h.b16 %v100
    %v540 = vunpack.c.l.b16 %v101
    %v541 = vunpack.c.h.b16 %v101
    %v542 = vunpack.c.l.b16 %v102
    %v543 = vunpack.c.h.b16 %v102
    %v544 = vunpack.c.l.b16 %v103
    %v545 = vunpack.c.h.b16 %v103
    %v546 = vunpack.c.l.b16 %v104
    %v547 = vunpack.c.h.b16 %v104
    %v548 = vunpack.c.l.b16 %v105
    %v549 = vunpack.c.h.b16 %v105
    %v550 = vunpack.c.l.b16 %v106
    %v551 = vunpack.c.h.b16 %v106
    %v552 = vunpack.c.l.b16 %v107
    %v553 = vunpack.c.h.b16 %v107
    %v554 = vunpack.c.l.b16 %v108
    %v555 = vunpack.c.h.b16 %v108
    %v556 = vunpack.c.l.b16 %v109
    %v557 = vunpack.c.h.b16 %v109
    %v558 = vunpack.c.l.b16 %v110
    %v559 = vunpack.c.h.b16 %v110
    %v560 = vunpack.c.l.b16 %v111
    %v561 = vunpack.c.h.b16 %v111
    %v562 = vunpack.c.l.b16 %v112
    %v563 = vunpack.c.h.b16 %v112
    %v564 = vunpack.c.l.b16 %v113
    %v565 = vunpack.c.h.b16 %v113
    %v566 = vunpack.c.l.b16 %v114
    %v567 = vunpack.c.h.b16 %v114
    %v568 = vunpack.c.l.b16 %v115
    %v569 = vunpack.c.h.b16 %v115
    %v570 = vunpack.c.l.b16 %v116
    %v571 = vunpack.c.h.b16 %v116
    %v572 = vunpack.c.l.b16 %v117
    %v573 = vunpack.c.h.b16 %v117
    %v574 = vunpack.c.l.b16 %v118
    %v575 = vunpack.c.h.b16 %v118
    %v576 = vunpack.c.l.b16 %v119
    %v577 = vunpack.c.h.b16 %v119
    %v578 = vunpack.c.l.b16 %v120
    %v579 = vunpack.c.h.b16 %v120
    %v580 = vunpack.c.l.b16 %v121
    %v581 = vunpack.c.h.b16 %v121
    %v582 = vunpack.c.l.b16 %v122
    %v583 = vunpack.c.h.b16 %v122
    %v584 = vunpack.c.l.b16 %v123
    %v585 = vunpack.c.h.b16 %v123
    %v586 = vunpack.c.l.b16 %v124
    %v587 = vunpack.c.h.b16 %v124
    %v588 = vunpack.c.l.b16 %v125
    %v589 = vunpack.c.h.b16 %v125
    %v590 = vunpack.c.l.b16 %v126
    %v591 = vunpack.c.h.b16 %v126
    %v592 = vunpack.c.l.b16 %v127
    %v593 = vunpack.c.h.b16 %v127
    %v594 = vunpack.c.l.b16 %v128
    %v595 = vunpack.c.h.b16 %v128
    %v596 = vunpack.c.l.b16 %v129
    %v597 = vunpack.c.h.b16 %v129
    %v598 = vunpack.c.l.b16 %v130
    %v599 = vunpack.c.h.b16 %v130
    %v600 = vunpack.c.l.b16 %v131
    %v601 = vunpack.c.h.b16 %v131
    %v602 = vunpack.c.l.b16 %v132
    %v603 = vunpack.c.h.b16 %v132
    %v604 = vunpack.c.l.b16 %v133
    %v605 = vunpack.c.h.b16 %v133
    %v606 = vunpack.c.l.b16 %v134
    %v607 = vunpack.c.h.b16 %v134
    %v608 = vunpack.c.l.b16 %v135
    %v609 = vunpack.c.h.b16 %v135
    %v610 = vunpack.c.l.b16 %v136
    %v611 = vunpack.c.h.b16 %v136
    %v612 = vunpack.c.l.b16 %v137
    %v613 = vunpack.c.h.b16 %v137
    %v614 = vunpack.c.l.b16 %v138
    %v615 = vunpack.c.h.b16 %v138
    %v616 = vunpack.c.l.b16 %v139
    %v617 = vunpack.c.h.b16 %v139
    %v618 = vunpack.c.l.b16 %v140
    %v619 = vunpack.c.h.b16 %v140
    %v620 = vunpack.c.l.b16 %v141
    %v621 = vunpack.c.h.b16 %v141
    %v622 = vunpack.c.l.b16 %v142
    %v623 = vunpack.c.h.b16 %v142
    %v624 = vunpack.c.l.b16 %v143
    %v625 = vunpack.c.h.b16 %v143
    %v626 = vunpack.c.l.b16 %v144
    %v627 = vunpack.c.h.b16 %v144
    %v628 = vunpack.c.l.b16 %v145
    %v629 = vunpack.c.h.b16 %v145
    %v630 = vunpack.c.l.b16 %v146
    %v631 = vunpack.c.h.b16 %v146
    %v632 = vunpack.c.l.b16 %v147
    %v633 = vunpack.c.h.b16 %v147
    %v634 = vunpack.c.l.b16 %v148
    %v635 = vunpack.c.h.b16 %v148
    %v636 = vunpack.c.l.b16 %v149
    %v637 = vunpack.c.h.b16 %v149
    %v638 = vunpack.c.l.b16 %v150
    %v639 = vunpack.c.h.b16 %v150
    %v640 = vunpack.c.l.b16 %v151
    %v641 = vunpack.c.h.b16 %v151
    %v642 = vunpack.c.l.b16 %v152
    %v643 = vunpack.c.h.b16 %v152
    %v644 = vunpack.c.l.b16 %v153
    %v645 = vunpack.c.h.b16 %v153
    %v646 = vunpack.c.l.b16 %v154
    %v647 = vunpack.c.h.b16 %v154
    %v648 = vunpack.c.l.b16 %v155
    %v649 = vunpack.c.h.b16 %v155
    %v650 = vunpack.c.l.b16 %v156
    %v651 = vunpack.c.h.b16 %v156
    %v652 = vunpack.c.l.b16 %v157
    %v653 = vunpack.c.h.b16 %v157
    %v654 = vunpack.c.l.b16 %v158
    %v655 = vunpack.c.h.b16 %v158
    %v656 = vunpack.c.l.b16 %v159
    %v657 = vunpack.c.h.b16 %v159
    %v658 = vunpack.c.l.b16 %v160
    %v659 = vunpack.c.h.b16 %v160
    %v660 = vunpack.c.l.b16 %v161
    %v661 = vunpack.c.h.b16 %v161
    %v662 = vunpack.c.l.b16 %v162
    %v663 = vunpack.c.h.b16 %v162
    %v664 = vunpack.c.l.b16 %v163
    %v665 = vunpack.c.h.b16 %v163
    %v666 = vunpack.c.l.b16 %v164
    %v667 = vunpack.c.h.b16 %v164
    %v668 = vunpack.c.l.b16 %v165
    %v669 = vunpack.c.h.b16 %v165
    %v670 = vunpack.c.l.b16 %v166
    %v671 = vunpack.c.h.b16 %v166
    %v672 = vunpack.c.l.b16 %v167
    %v673 = vunpack.c.h.b16 %v167
    %v674 = vunpack.c.l.b16 %v168
    %v675 = vunpack.c.h.b16 %v168
    %v676 = vunpack.c.l.b16 %v169
    %v677 = vunpack.c.h.b16 %v169
    %v678 = vunpack.c.l.b16 %v170
    %v679 = vunpack.c.h.b16 %v170
    %v680 = vunpack.c.l.b16 %v171
    %v681 = vunpack.c.h.b16 %v171
    %v682 = vunpack.c.l.b16 %v172
    %v683 = vunpack.c.h.b16 %v172
    %v684 = vunpack.c.l.b16 %v173
    %v685 = vunpack.c.h.b16 %v173
    %v686 = vunpack.c.l.b16 %v174
    %v687 = vunpack.c.h.b16 %v174
    %v688 = vunpack.c.l.b16 %v175
    %v689 = vunpack.c.h.b16 %v175
    %v690 = vunpack.c.l.b16 %v176
    %v691 = vunpack.c.h.b16 %v176
    %v692 = vunpack.c.l.b16 %v177
    %v693 = vunpack.c.h.b16 %v177
    %v694 = vunpack.c.l.b16 %v178
    %v695 = vunpack.c.h.b16 %v178
    %v696 = vunpack.c.l.b16 %v179
    %v697 = vunpack.c.h.b16 %v179
    %v698 = vunpack.c.l.b16 %v180
    %v699 = vunpack.c.h.b16 %v180
    %v700 = vunpack.c.l.b16 %v181
    %v701 = vunpack.c.h.b16 %v181
    %v702 = vunpack.c.l.b16 %v182
    %v703 = vunpack.c.h.b16 %v182
    %v704 = vunpack.c.l.b16 %v183
    %v705 = vunpack.c.h.b16 %v183
    %v706 = vunpack.c.l.b16 %v184
    %v707 = vunpack.c.h.b16 %v184
    %v708 = vunpack.c.l.b16 %v185
    %v709 = vunpack.c.h.b16 %v185
    %v710 = vunpack.c.l.b16 %v186
    %v711 = vunpack.c.h.b16 %v186
    %v712 = vunpack.c.l.b16 %v187
    %v713 = vunpack.c.h.b16 %v187
    %v714 = vunpack.c.l.b16 %v188
    %v715 = vunpack.c.h.b16 %v188
    %v716 = vunpack.c.l.b16 %v189
    %v717 = vunpack.c.h.b16 %v189
    %v718 = vunpack.c.l.b16 %v190
    %v719 = vunpack.c.h.b16 %v190
    %v720 = vunpack.c.l.b16 %v191
    %v721 = vunpack.c.h.b16 %v191
    %v722 = vunpack.c.l.b16 %v192
    %v723 = vunpack.c.h.b16 %v192
    %v724 = vunpack.c.l.b16 %v193
    %v725 = vunpack.c.h.b16 %v193
    %v726 = vunpack.c.l.b16 %v194
    %v727 = vunpack.c.h.b16 %v194
    %v728 = vunpack.c.l.b16 %v195
    %v729 = vunpack.c.h.b16 %v195
    %v730 = vunpack.c.l.b16 %v196
    %v731 = vunpack.c.h.b16 %v196
    %v732 = vunpack.c.l.b16 %v197
    %v733 = vunpack.c.h.b16 %v197
    %v734 = vunpack.c.l.b16 %v198
    %v735 = vunpack.c.h.b16 %v198
    %v736 = vunpack.c.l.b16 %v199
    %v737 = vunpack.c.h.b16 %v199
    %v738 = vunpack.c.l.b16 %v200
    %v739 = vunpack.c.h.b16 %v200
    %v740 = vunpack.c.l.b16 %v201
    %v741 = vunpack.c.h.b16 %v201
    %v742 = vunpack.c.l.b16 %v202
    %v743 = vunpack.c.h.b16 %v202
    %v744 = vunpack.c.l.b16 %v203
    %v745 = vunpack.c.h.b16 %v203
    %v746 = vunpack.c.l.b16 %v204
    %v747 = vunpack.c.h.b16 %v204
    %v748 = vunpack.c.l.b16 %v205
    %v749 = vunpack.c.h.b16 %v205
    %v750 = vunpack.c.l.b16 %v206
    %v751 = vunpack.c.h.b16 %v206
    %v752 = vunpack.c.l.b16 %v207
    %v753 = vunpack.c.h.b16 %v207
    %v754 = vunpack.c.l.b16 %v208
    %v755 = vunpack.c.h.b16 %v208
    %v756 = vunpack.c.l.b16 %v209
    %v757 = vunpack.c.h.b16 %v209
    %v758 = vunpack.c.l.b16 %v210
    %v759 = vunpack.c.h.b16 %v210
    %v760 = vunpack.c.l.b16 %v211
    %v761 = vunpack.c.h.b16 %v211
    %v762 = vunpack.c.l.b16 %v212
    %v763 = vunpack.c.h.b16 %v212
    %v764 = vunpack.c.l.b16 %v213
    %v765 = vunpack.c.h.b16 %v213
    %v766 = vunpack.c.l.b16 %v214
    %v767 = vunpack.c.h.b16 %v214
    %v768 = vunpack.c.l.b16 %v215
    %v769 = vunpack.c.h.b16 %v215
    %v770 = vunpack.c.l.b16 %v216
    %v771 = vunpack.c.h.b16 %v216
    %v772 = vunpack.c.l.b16 %v217
    %v773 = vunpack.c.h.b16 %v217
    %v774 = vunpack.c.l.b16 %v218
    %v775 = vunpack.c.h.b16 %v218
    %v776 = vunpack.c.l.b16 %v219
    %v777 = vunpack.c.h.b16 %v219
    %v778 = vunpack.c.l.b16 %v220
    %v779 = vunpack.c.h.b16 %v220
    %v780 = vunpack.c.l.b16 %v221
    %v781 = vunpack.c.h.b16 %v221
    %v782 = vunpack.c.l.b16 %v222
    %v783 = vunpack.c.h.b16 %v222
    %v784 = vunpack.c.l.b16 %v223
    %v785 = vunpack.c.h.b16 %v223
    %v786 = vunpack.c.l.b16 %v224
    %v787 = vunpack.c.h.b16 %v224
    %v788 = vunpack.c.l.b16 %v225
    %v789 = vunpack.c.h.b16 %v225
    %v790 = vunpack.c.l.b16 %v226
    %v791 = vunpack.c.h.b16 %v226
    %v792 = vunpack.c.l.b16 %v227
    %v793 = vunpack.c.h.b16 %v227
    %v794 = vunpack.c.l.b16 %v228
    %v795 = vunpack.c.h.b16 %v228
    %v796 = vunpack.c.l.b16 %v229
    %v797 = vunpack.c.h.b16 %v229
    %v798 = vunpack.c.l.b16 %v230
    %v799 = vunpack.c.h.b16 %v230
    %v800 = vunpack.c.l.b16 %v231
    %v801 = vunpack.c.h.b16 %v231
    %v802 = vunpack.c.l.b16 %v232
    %v803 = vunpack.c.h.b16 %v232
    %v804 = vunpack.c.l.b16 %v233
    %v805 = vunpack.c.h.b16 %v233
    %v806 = vunpack.c.l.b16 %v234
    %v807 = vunpack.c.h.b16 %v234
    %v808 = vunpack.c.l.b16 %v235
    %v809 = vunpack.c.h.b16 %v235
    %v810 = vunpack.c.l.b16 %v236
    %v811 = vunpack.c.h.b16 %v236
    %v812 = vunpack.c.l.b16 %v237
    %v813 = vunpack.c.h.b16 %v237
    %v814 = vunpack.c.l.b16 %v238
    %v815 = vunpack.c.h.b16 %v238
    %v816 = vunpack.c.l.b16 %v239
    %v817 = vunpack.c.h.b16 %v239
    %v818 = vunpack.c.l.b16 %v240
    %v819 = vunpack.c.h.b16 %v240
    %v820 = vunpack.c.l.b16 %v241
    %v821 = vunpack.c.h.b16 %v241
    %v822 = vunpack.c.l.b16 %v242
    %v823 = vunpack.c.h.b16 %v242
    %v824 = vunpack.c.l.b16 %v243
    %v825 = vunpack.c.h.b16 %v243
    %v826 = vunpack.c.l.b16 %v244
    %v827 = vunpack.c.h.b16 %v244
    %v828 = vunpack.c.l.b16 %v245
    %v829 = vunpack.c.h.b16 %v245
    %v830 = vunpack.c.l.b16 %v246
    %v831 = vunpack.c.h.b16 %v246
    %v832 = vunpack.c.l.b16 %v247
    %v833 = vunpack.c.h.b16 %v247
    %v834 = vunpack.c.l.b16 %v248
    %v835 = vunpack.c.h.b16 %v248
    %v836 = vunpack.c.l.b16 %v249
    %v837 = vunpack.c.h.b16 %v249
    %v838 = vunpack.c.l.b16 %v250
    %v839 = vunpack.c.h.b16 %v250
    %v840 = vunpack.c.l.b16 %v251
    %v841 = vunpack.c.h.b16 %v251
    %v842 = vunpack.c.l.b16 %v252
    %v843 = vunpack.c.h.b16 %v252
    %v844 = vunpack.c.l.b16 %v253
    %v845 = vunpack.c.h.b16 %v253
    %v846 = vunpack.c.l.b16 %v254
    %v847 = vunpack.c.h.b16 %v254
    %v848 = vunpack.c.l.b16 %v255
    %v849 = vunpack.c.h.b16 %v255
    %v850 = vunpack.c.l.b16 %v256
    %v851 = vunpack.c.h.b16 %v256
    %v852 = vunpack.c.l.b16 %v257
    %v853 = vunpack.c.h.b16 %v257
    %v854 = vunpack.c.l.b16 %v258
    %v855 = vunpack.c.h.b16 %v258
    %v856 = vpack.c.b16 %v476, %v472
    %v857 = vpack.c.b16 %v477, %v473
    %v858 = vpack.c.b16 %v478, %v474
    %v859 = vpack.c.b16 %v479, %v475
    %v860 = vpack.c.b16 %v484, %v480
    %v861 = vpack.c.b16 %v485, %v481
    %v862 = vpack.c.b16 %v486, %v482
    %v863 = vpack.c.b16 %v487, %v483
    %v864 = vpack.c.b16 %v492, %v488
    %v865 = vpack.c.b16 %v493, %v489
    %v866 = vpack.c.b16 %v494, %v490
    %v867 = vpack.c.b16 %v495, %v491
    %v868 = vpack.c.b16 %v500, %v496
    %v869 = vpack.c.b16 %v501, %v497
    %v870 = vpack.c.b16 %v502, %v498
    %v871 = vpack.c.b16 %v503, %v499
    %v872 = vpack.c.b16 %v508, %v504
    %v873 = vpack.c.b16 %v509, %v505
    %v874 = vpack.c.b16 %v510, %v506
    %v875 = vpack.c.b16 %v511, %v507
    %v876 = vpack.c.b16 %v516, %v512
    %v877 = vpack.c.b16 %v517, %v513
    %v878 = vpack.c.b16 %v518, %v514
    %v879 = vpack.c.b16 %v519, %v515
    %v880 = vpack.c.b16 %v524, %v520
    %v881 = vpack.c.b16 %v525, %v521
    %v882 = vpack.c.b16 %v526, %v522
    %v883 = vpack.c.b16 %v527, %v523
    %v884 = vpack.c.b16 %v532, %v528
    %v885 = vpack.c.b16 %v533, %v529
    %v886 = vpack.c.b16 %v534, %v530
    %v887 = vpack.c.b16 %v535, %v531
    %v888 = vpack.c.b16 %v540, %v536
    %v889 = vpack.c.b16 %v541, %v537
    %v890 = vpack.c.b16 %v542, %v538
    %v891 = vpack.c.b16 %v543, %v539
    %v892 = vpack.c.b16 %v548, %v544
    %v893 = vpack.c.b16 %v549, %v545
    %v894 = vpack.c.b16 %v550, %v546
    %v895 = vpack.c.b16 %v551, %v547
    %v896 = vpack.c.b16 %v556, %v552
    %v897 = vpack.c.b16 %v557, %v553
    %v898 = vpack.c.b16 %v558, %v554
    %v899 = vpack.c.b16 %v559, %v555
    %v900 = vpack.c.b16 %v564, %v560
    %v901 = vpack.c.b16 %v565, %v561
    %v902 = vpack.c.b16 %v566, %v562
    %v903 = vpack.c.b16 %v567, %v563
    %v904 = vpack.c.b16 %v572, %v568
    %v905 = vpack.c.b16 %v573, %v569
    %v906 = vpack.c.b16 %v574, %v570
    %v907 = vpack.c.b16 %v575, %v571
    %v908 = vpack.c.b16 %v580, %v576
    %v909 = vpack.c.b16 %v581, %v577
    %v910 = vpack.c.b16 %v582, %v578
    %v911 = vpack.c.b16 %v583, %v579
    %v912 = vpack.c.b16 %v588, %v584
    %v913 = vpack.c.b16 %v589, %v585
    %v914 = vpack.c.b16 %v590, %v586
    %v915 = vpack.c.b16 %v591, %v587
    %v916 = vpack.c.b16 %v596, %v592
    %v917 = vpack.c.b16 %v597, %v593
    %v918 = vpack.c.b16 %v598, %v594
    %v919 = vpack.c.b16 %v599, %v595
    %v920 = vpack.c.b16 %v604, %v600
    %v921 = vpack.c.b16 %v605, %v601
    %v922 = vpack.c.b16 %v606, %v602
    %v923 = vpack.c.b16 %v607, %v603
    %v924 = vpack.c.b16 %v612, %v608
    %v925 = vpack.c.b16 %v613, %v609
    %v926 = vpack.c.b16 %v614, %v610
    %v927 = vpack.c.b16 %v615, %v611
    %v928 = vpack.c.b16 %v620, %v616
    %v929 = vpack.c.b16 %v621, %v617
    %v930 = vpack.c.b16 %v622, %v618
    %v931 = vpack.c.b16 %v623, %v619
    %v932 = vpack.c.b16 %v628, %v624
    %v933 = vpack.c.b16 %v629, %v625
    %v934 = vpack.c.b16 %v630, %v626
    %v935 = vpack.c.b16 %v631, %v627
    %v936 = vpack.c.b16 %v636, %v632
    %v937 = vpack.c.b16 %v637, %v633
    %v938 = vpack.c.b16 %v638, %v634
    %v939 = vpack.c.b16 %v639, %v635
    %v940 = vpack.c.b16 %v644, %v640
    %v941 = vpack.c.b16 %v645, %v641
    %v942 = vpack.c.b16 %v646, %v642
    %v943 = vpack.c.b16 %v647, %v643
    %v944 = vpack.c.b16 %v652, %v648
    %v945 = vpack.c.b16 %v653, %v649
    %v946 = vpack.c.b16 %v654, %v650
    %v947 = vpack.c.b16 %v655, %v651
    %v948 = vpack.c.b16 %v660, %v656
    %v949 = vpack.c.b16 %v661, %v657
    %v950 = vpack.c.b16 %v662, %v658
    %v951 = vpack.c.b16 %v663, %v659
    %v952 = vpack.c.b16 %v668, %v664
    %v953 = vpack.c.b16 %v669, %v665
    %v954 = vpack.c.b16 %v670, %v666
    %v955 = vpack.c.b16 %v671, %v667
    %v956 = vpack.c.b16 %v676, %v672
    %v957 = vpack.c.b16 %v677, %v673
    %v958 = vpack.c.b16 %v678, %v674
    %v959 = vpack.c.b16 %v679, %v675
    %v960 = vpack.c.b16 %v684, %v680
    %v961 = vpack.c.b16 %v685, %v681
    %v962 = vpack.c.b16 %v686, %v682
    %v963 = vpack.c.b16 %v687, %v683
    %v964 = vpack.c.b16 %v692, %v688
    %v965 = vpack.c.b16 %v693, %v689
    %v966 = vpack.c.b16 %v694, %v690
    %v967 = vpack.c.b16 %v695, %v691
    %v968 = vpack.c.b16 %v700, %v696
    %v969 = vpack.c.b16 %v701, %v697
    %v970 = vpack.c.b16 %v702, %v698
    %v971 = vpack.c.b16 %v703, %v699
    %v972 = vpack.c.b16 %v708, %v704
    %v973 = vpack.c.b16 %v709, %v705
    %v974 = vpack.c.b16 %v710, %v706
    %v975 = vpack.c.b16 %v711, %v707
    %v976 = vpack.c.b16 %v716, %v712
    %v977 = vpack.c.b16 %v717, %v713
    %v978 = vpack.c.b16 %v718, %v714
    %v979 = vpack.c.b16 %v719, %v715
    %v980 = vpack.c.b16 %v724, %v720
    %v981 = vpack.c.b16 %v725, %v721
    %v982 = vpack.c.b16 %v726, %v722
    %v983 = vpack.c.b16 %v727, %v723
    %v984 = vpack.c.b16 %v732, %v728
    %v985 = vpack.c.b16 %v733, %v729
    %v986 = vpack.c.b16 %v734, %v730
    %v987 = vpack.c.b16 %v735, %v731
    %v988 = vpack.c.b16 %v740, %v736
    %v989 = vpack.c.b16 %v741, %v737
    %v990 = vpack.c.b16 %v742, %v738
    %v991 = vpack.c.b16 %v743, %v739
    %v992 = vpack.c.b16 %v748, %v744
    %v993 = vpack.c.b16 %v749, %v745
    %v994 = vpack.c.b16 %v750, %v746
    %v995 = vpack.c.b16 %v751, %v747
    %v996 = vpack.c.b16 %v756, %v752
    %v997 = vpack.c.b16 %v757, %v753
    %v998 = vpack.c.b16 %v758, %v754
    %v999 = vpack.c.b16 %v759, %v755
    %v1000 = vpack.c.b16 %v764, %v760
    %v1001 = vpack.c.b16 %v765, %v761
    %v1002 = vpack.c.b16 %v766, %v762
    %v1003 = vpack.c.b16 %v767, %v763
    %v1004 = vpack.c.b16 %v772, %v768
    %v1005 = vpack.c.b16 %v773, %v769
    %v1006 = vpack.c.b16 %v774, %v770
    %v1007 = vpack.c.b16 %v775, %v771
    %v1008 = vpack.c.b16 %v780, %v776
    %v1009 = vpack.c.b16 %v781, %v777
    %v1010 = vpack.c.b16 %v782, %v778
    %v1011 = vpack.c.b16 %v783, %v779
    %v1012 = vpack.c.b16 %v788, %v784
    %v1013 = vpack.c.b16 %v789, %v785
    %v1014 = vpack.c.b16 %v790, %v786
    %v1015 = vpack.c.b16 %v791, %v787
    %v1016 = vpack.c.b16 %v796, %v792
    %v1017 = vpack.c.b16 %v797, %v793
    %v1018 = vpack.c.b16 %v798, %v794
    %v1019 = vpack.c.b16 %v799, %v795
    %v1020 = vpack.c.b16 %v804, %v800
    %v1021 = vpack.c.b16 %v805, %v801
    %v1022 = vpack.c.b16 %v806, %v802
    %v1023 = vpack.c.b16 %v807, %v803
    %v1024 = vpack.c.b16 %v812, %v808
    %v1025 = vpack.c.b16 %v813, %v809
    %v1026 = vpack.c.b16 %v814, %v810
    %v1027 = vpack.c.b16 %v815, %v811
    %v1028 = vpack.c.b16 %v820, %v816
    %v1029 = vpack.c.b16 %v821, %v817
    %v1030 = vpack.c.b16 %v822, %v818
    %v1031 = vpack.c.b16 %v823, %v819
    %v1032 = vpack.c.b16 %v828, %v824
    %v1033 = vpack.c.b16 %v829, %v825
    %v1034 = vpack.c.b16 %v830, %v826
    %v1035 = vpack.c.b16 %v831, %v827
    %v1036 = vpack.c.b16 %v836, %v832
    %v1037 = vpack.c.b16 %v837, %v833
    %v1038 = vpack.c.b16 %v838, %v834
    %v1039 = vpack.c.b16 %v839, %v835
    %v1040 = vpack.c.b16 %v844, %v840
    %v1041 = vpack.c.b16 %v845, %v841
    %v1042 = vpack.c.b16 %v846, %v842
    %v1043 = vpack.c.b16 %v847, %v843
    %v1044 = vpack.c.b16 %v852, %v848
    %v1045 = vpack.c.b16 %v853, %v849
    %v1046 = vpack.c.b16 %v854, %v850
    %v1047 = vpack.c.b16 %v855, %v851
    %1240 = vmatpush.bf16.msra.mxu0 %v884
    %1241 = vmatpush.bf16.msra.mxu0 %v880
    %1242 = vmatpush.bf16.msra.mxu0 %v876
    %1243 = vmatpush.bf16.msra.mxu0 %v872
    %1244 = vmatpush.bf16.msra.mxu0 %v868
    %1245 = vmatpush.bf16.msra.mxu0 %v864
    %1246 = vmatpush.bf16.msra.mxu0 %v860
    %1247 = vmatpush.bf16.msra.mxu0 %v856
    %1248 = vmatmul.bf16.gmra.mxu0 %v268
    %v1249 = vpop.f32.mrf.mxu0
    %v1250 = vadd.f32 0.0, %v1249
    %v1251 = vpop.f32.mrf.mxu0
    %1252 = vdwg.mxu0
    %1253 = vmatpush.bf16.msra.mxu0 %v916
    %1254 = vmatpush.bf16.msra.mxu0 %v912
    %1255 = vmatpush.bf16.msra.mxu0 %v908
    %1256 = vmatpush.bf16.msra.mxu0 %v904
    %1257 = vmatpush.bf16.msra.mxu0 %v900
    %1258 = vmatpush.bf16.msra.mxu0 %v896
    %1259 = vmatpush.bf16.msra.mxu0 %v892
    %1260 = vmatpush.bf16.msra.mxu0 %v888
    %1261 = vmatmul.bf16.gmra.mxu0 %v269
    %v1262 = vpop.f32.mrf.mxu0
    %v1263 = vadd.f32 %v1250, %v1262
    %v1264 = vpop.f32.mrf.mxu0
    %1265 = vdwg.mxu0
    %1266 = vmatpush.bf16.msra.mxu0 %v948
    %1267 = vmatpush.bf16.msra.mxu0 %v944
    %1268 = vmatpush.bf16.msra.mxu0 %v940
    %1269 = vmatpush.bf16.msra.mxu0 %v936
    %1270 = vmatpush.bf16.msra.mxu0 %v932
    %1271 = vmatpush.bf16.msra.mxu0 %v928
    %1272 = vmatpush.bf16.msra.mxu0 %v924
    %1273 = vmatpush.bf16.msra.mxu0 %v920
    %1274 = vmatmul.bf16.gmra.mxu0 %v270
    %v1275 = vpop.f32.mrf.mxu0
    %v1276 = vadd.f32 %v1263, %v1275
    %v1277 = vpop.f32.mrf.mxu0
    %1278 = vdwg.mxu0
    %1279 = vmatpush.bf16.msra.mxu0 %v980
    %1280 = vmatpush.bf16.msra.mxu0 %v976
    %1281 = vmatpush.bf16.msra.mxu0 %v972
    %1282 = vmatpush.bf16.msra.mxu0 %v968
    %1283 = vmatpush.bf16.msra.mxu0 %v964
    %1284 = vmatpush.bf16.msra.mxu0 %v960
    %1285 = vmatpush.bf16.msra.mxu0 %v956
    %1286 = vmatpush.bf16.msra.mxu0 %v952
    %1287 = vmatmul.bf16.gmra.mxu0 %v271
    %v1288 = vpop.f32.mrf.mxu0
    %v1289 = vadd.f32 %v1276, %v1288
    %v1290 = vpop.f32.mrf.mxu0
    %1291 = vdwg.mxu0
    %1292 = vmatpush.bf16.msra.mxu0 %v1012
    %1293 = vmatpush.bf16.msra.mxu0 %v1008
    %1294 = vmatpush.bf16.msra.mxu0 %v1004
    %1295 = vmatpush.bf16.msra.mxu0 %v1000
    %1296 = vmatpush.bf16.msra.mxu0 %v996
    %1297 = vmatpush.bf16.msra.mxu0 %v992
    %1298 = vmatpush.bf16.msra.mxu0 %v988
    %1299 = vmatpush.bf16.msra.mxu0 %v984
    %1300 = vmatmul.bf16.gmra.mxu0 %v272
    %v1301 = vpop.f32.mrf.mxu0
    %v1302 = vadd.f32 %v1289, %v1301
    %v1303 = vpop.f32.mrf.mxu0
    %1304 = vdwg.mxu0
    %1305 = vmatpush.bf16.msra.mxu0 %v1044
    %1306 = vmatpush.bf16.msra.mxu0 %v1040
    %1307 = vmatpush.bf16.msra.mxu0 %v1036
    %1308 = vmatpush.bf16.msra.mxu0 %v1032
    %1309 = vmatpush.bf16.msra.mxu0 %v1028
    %1310 = vmatpush.bf16.msra.mxu0 %v1024
    %1311 = vmatpush.bf16.msra.mxu0 %v1020
    %1312 = vmatpush.bf16.msra.mxu0 %v1016
    %1313 = vmatmul.bf16.gmra.mxu0 %v273
    %v1314 = vpop.f32.mrf.mxu0
    %v1315 = vadd.f32 %v1302, %v1314
    %v1316 = vpop.f32.mrf.mxu0
    %1317 = vdwg.mxu0
    %1318 = vmatpush.bf16.msra.mxu0 %v885
    %1319 = vmatpush.bf16.msra.mxu0 %v881
    %1320 = vmatpush.bf16.msra.mxu0 %v877
    %1321 = vmatpush.bf16.msra.mxu0 %v873
    %1322 = vmatpush.bf16.msra.mxu0 %v869
    %1323 = vmatpush.bf16.msra.mxu0 %v865
    %1324 = vmatpush.bf16.msra.mxu0 %v861
    %1325 = vmatpush.bf16.msra.mxu0 %v857
    %1326 = vmatmul.bf16.gmra.mxu0 %v268
    %v1327 = vpop.f32.mrf.mxu0
    %v1328 = vadd.f32 0.0, %v1327
    %v1329 = vpop.f32.mrf.mxu0
    %1330 = vdwg.mxu0
    %1331 = vmatpush.bf16.msra.mxu0 %v917
    %1332 = vmatpush.bf16.msra.mxu0 %v913
    %1333 = vmatpush.bf16.msra.mxu0 %v909
    %1334 = vmatpush.bf16.msra.mxu0 %v905
    %1335 = vmatpush.bf16.msra.mxu0 %v901
    %1336 = vmatpush.bf16.msra.mxu0 %v897
    %1337 = vmatpush.bf16.msra.mxu0 %v893
    %1338 = vmatpush.bf16.msra.mxu0 %v889
    %1339 = vmatmul.bf16.gmra.mxu0 %v269
    %v1340 = vpop.f32.mrf.mxu0
    %v1341 = vadd.f32 %v1328, %v1340
    %v1342 = vpop.f32.mrf.mxu0
    %1343 = vdwg.mxu0
    %1344 = vmatpush.bf16.msra.mxu0 %v949
    %1345 = vmatpush.bf16.msra.mxu0 %v945
    %1346 = vmatpush.bf16.msra.mxu0 %v941
    %1347 = vmatpush.bf16.msra.mxu0 %v937
    %1348 = vmatpush.bf16.msra.mxu0 %v933
    %1349 = vmatpush.bf16.msra.mxu0 %v929
    %1350 = vmatpush.bf16.msra.mxu0 %v925
    %1351 = vmatpush.bf16.msra.mxu0 %v921
    %1352 = vmatmul.bf16.gmra.mxu0 %v270
    %v1353 = vpop.f32.mrf.mxu0
    %v1354 = vadd.f32 %v1341, %v1353
    %v1355 = vpop.f32.mrf.mxu0
    %1356 = vdwg.mxu0
    %1357 = vmatpush.bf16.msra.mxu0 %v981
    %1358 = vmatpush.bf16.msra.mxu0 %v977
    %1359 = vmatpush.bf16.msra.mxu0 %v973
    %1360 = vmatpush.bf16.msra.mxu0 %v969
    %1361 = vmatpush.bf16.msra.mxu0 %v965
    %1362 = vmatpush.bf16.msra.mxu0 %v961
    %1363 = vmatpush.bf16.msra.mxu0 %v957
    %1364 = vmatpush.bf16.msra.mxu0 %v953
    %1365 = vmatmul.bf16.gmra.mxu0 %v271
    %v1366 = vpop.f32.mrf.mxu0
    %v1367 = vadd.f32 %v1354, %v1366
    %v1368 = vpop.f32.mrf.mxu0
    %1369 = vdwg.mxu0
    %1370 = vmatpush.bf16.msra.mxu0 %v1013
    %1371 = vmatpush.bf16.msra.mxu0 %v1009
    %1372 = vmatpush.bf16.msra.mxu0 %v1005
    %1373 = vmatpush.bf16.msra.mxu0 %v1001
    %1374 = vmatpush.bf16.msra.mxu0 %v997
    %1375 = vmatpush.bf16.msra.mxu0 %v993
    %1376 = vmatpush.bf16.msra.mxu0 %v989
    %1377 = vmatpush.bf16.msra.mxu0 %v985
    %1378 = vmatmul.bf16.gmra.mxu0 %v272
    %v1379 = vpop.f32.mrf.mxu0
    %v1380 = vadd.f32 %v1367, %v1379
    %v1381 = vpop.f32.mrf.mxu0
    %1382 = vdwg.mxu0
    %1383 = vmatpush.bf16.msra.mxu0 %v1045
    %1384 = vmatpush.bf16.msra.mxu0 %v1041
    %1385 = vmatpush.bf16.msra.mxu0 %v1037
    %1386 = vmatpush.bf16.msra.mxu0 %v1033
    %1387 = vmatpush.bf16.msra.mxu0 %v1029
    %1388 = vmatpush.bf16.msra.mxu0 %v1025
    %1389 = vmatpush.bf16.msra.mxu0 %v1021
    %1390 = vmatpush.bf16.msra.mxu0 %v1017
    %1391 = vmatmul.bf16.gmra.mxu0 %v273
    %v1392 = vpop.f32.mrf.mxu0
    %v1393 = vadd.f32 %v1380, %v1392
    %v1394 = vpop.f32.mrf.mxu0
    %1395 = vdwg.mxu0
    %1396 = vmatpush.bf16.msra.mxu0 %v886
    %1397 = vmatpush.bf16.msra.mxu0 %v882
    %1398 = vmatpush.bf16.msra.mxu0 %v878
    %1399 = vmatpush.bf16.msra.mxu0 %v874
    %1400 = vmatpush.bf16.msra.mxu0 %v870
    %1401 = vmatpush.bf16.msra.mxu0 %v866
    %1402 = vmatpush.bf16.msra.mxu0 %v862
    %1403 = vmatpush.bf16.msra.mxu0 %v858
    %1404 = vmatmul.bf16.gmra.mxu0 %v268
    %v1405 = vpop.f32.mrf.mxu0
    %v1406 = vadd.f32 0.0, %v1405
    %v1407 = vpop.f32.mrf.mxu0
    %1408 = vdwg.mxu0
    %1409 = vmatpush.bf16.msra.mxu0 %v918
    %1410 = vmatpush.bf16.msra.mxu0 %v914
    %1411 = vmatpush.bf16.msra.mxu0 %v910
    %1412 = vmatpush.bf16.msra.mxu0 %v906
    %1413 = vmatpush.bf16.msra.mxu0 %v902
    %1414 = vmatpush.bf16.msra.mxu0 %v898
    %1415 = vmatpush.bf16.msra.mxu0 %v894
    %1416 = vmatpush.bf16.msra.mxu0 %v890
    %1417 = vmatmul.bf16.gmra.mxu0 %v269
    %v1418 = vpop.f32.mrf.mxu0
    %v1419 = vadd.f32 %v1406, %v1418
    %v1420 = vpop.f32.mrf.mxu0
    %1421 = vdwg.mxu0
    %1422 = vmatpush.bf16.msra.mxu0 %v950
    %1423 = vmatpush.bf16.msra.mxu0 %v946
    %1424 = vmatpush.bf16.msra.mxu0 %v942
    %1425 = vmatpush.bf16.msra.mxu0 %v938
    %1426 = vmatpush.bf16.msra.mxu0 %v934
    %1427 = vmatpush.bf16.msra.mxu0 %v930
    %1428 = vmatpush.bf16.msra.mxu0 %v926
    %1429 = vmatpush.bf16.msra.mxu0 %v922
    %1430 = vmatmul.bf16.gmra.mxu0 %v270
    %v1431 = vpop.f32.mrf.mxu0
    %v1432 = vadd.f32 %v1419, %v1431
    %v1433 = vpop.f32.mrf.mxu0
    %1434 = vdwg.mxu0
    %1435 = vmatpush.bf16.msra.mxu0 %v982
    %1436 = vmatpush.bf16.msra.mxu0 %v978
    %1437 = vmatpush.bf16.msra.mxu0 %v974
    %1438 = vmatpush.bf16.msra.mxu0 %v970
    %1439 = vmatpush.bf16.msra.mxu0 %v966
    %1440 = vmatpush.bf16.msra.mxu0 %v962
    %1441 = vmatpush.bf16.msra.mxu0 %v958
    %1442 = vmatpush.bf16.msra.mxu0 %v954
    %1443 = vmatmul.bf16.gmra.mxu0 %v271
    %v1444 = vpop.f32.mrf.mxu0
    %v1445 = vadd.f32 %v1432, %v1444
    %v1446 = vpop.f32.mrf.mxu0
    %1447 = vdwg.mxu0
    %1448 = vmatpush.bf16.msra.mxu0 %v1014
    %1449 = vmatpush.bf16.msra.mxu0 %v1010
    %1450 = vmatpush.bf16.msra.mxu0 %v1006
    %1451 = vmatpush.bf16.msra.mxu0 %v1002
    %1452 = vmatpush.bf16.msra.mxu0 %v998
    %1453 = vmatpush.bf16.msra.mxu0 %v994
    %1454 = vmatpush.bf16.msra.mxu0 %v990
    %1455 = vmatpush.bf16.msra.mxu0 %v986
    %1456 = vmatmul.bf16.gmra.mxu0 %v272
    %v1457 = vpop.f32.mrf.mxu0
    %v1458 = vadd.f32 %v1445, %v1457
    %v1459 = vpop.f32.mrf.mxu0
    %1460 = vdwg.mxu0
    %1461 = vmatpush.bf16.msra.mxu0 %v1046
    %1462 = vmatpush.bf16.msra.mxu0 %v1042
    %1463 = vmatpush.bf16.msra.mxu0 %v1038
    %1464 = vmatpush.bf16.msra.mxu0 %v1034
    %1465 = vmatpush.bf16.msra.mxu0 %v1030
    %1466 = vmatpush.bf16.msra.mxu0 %v1026
    %1467 = vmatpush.bf16.msra.mxu0 %v1022
    %1468 = vmatpush.bf16.msra.mxu0 %v1018
    %1469 = vmatmul.bf16.gmra.mxu0 %v273
    %v1470 = vpop.f32.mrf.mxu0
    %v1471 = vadd.f32 %v1458, %v1470
    %v1472 = vpop.f32.mrf.mxu0
    %1473 = vdwg.mxu0
    %1474 = vmatpush.bf16.msra.mxu0 %v887
    %1475 = vmatpush.bf16.msra.mxu0 %v883
    %1476 = vmatpush.bf16.msra.mxu0 %v879
    %1477 = vmatpush.bf16.msra.mxu0 %v875
    %1478 = vmatpush.bf16.msra.mxu0 %v871
    %1479 = vmatpush.bf16.msra.mxu0 %v867
    %1480 = vmatpush.bf16.msra.mxu0 %v863
    %1481 = vmatpush.bf16.msra.mxu0 %v859
    %1482 = vmatmul.bf16.gmra.mxu0 %v268
    %v1483 = vpop.f32.mrf.mxu0
    %v1484 = vadd.f32 0.0, %v1483
    %v1485 = vpop.f32.mrf.mxu0
    %1486 = vdwg.mxu0
    %1487 = vmatpush.bf16.msra.mxu0 %v919
    %1488 = vmatpush.bf16.msra.mxu0 %v915
    %1489 = vmatpush.bf16.msra.mxu0 %v911
    %1490 = vmatpush.bf16.msra.mxu0 %v907
    %1491 = vmatpush.bf16.msra.mxu0 %v903
    %1492 = vmatpush.bf16.msra.mxu0 %v899
    %1493 = vmatpush.bf16.msra.mxu0 %v895
    %1494 = vmatpush.bf16.msra.mxu0 %v891
    %1495 = vmatmul.bf16.gmra.mxu0 %v269
    %v1496 = vpop.f32.mrf.mxu0
    %v1497 = vadd.f32 %v1484, %v1496
    %v1498 = vpop.f32.mrf.mxu0
    %1499 = vdwg.mxu0
    %1500 = vmatpush.bf16.msra.mxu0 %v951
    %1501 = vmatpush.bf16.msra.mxu0 %v947
    %1502 = vmatpush.bf16.msra.mxu0 %v943
    %1503 = vmatpush.bf16.msra.mxu0 %v939
    %1504 = vmatpush.bf16.msra.mxu0 %v935
    %1505 = vmatpush.bf16.msra.mxu0 %v931
    %1506 = vmatpush.bf16.msra.mxu0 %v927
    %1507 = vmatpush.bf16.msra.mxu0 %v923
    %1508 = vmatmul.bf16.gmra.mxu0 %v270
    %v1509 = vpop.f32.mrf.mxu0
    %v1510 = vadd.f32 %v1497, %v1509
    %v1511 = vpop.f32.mrf.mxu0
    %1512 = vdwg.mxu0
    %1513 = vmatpush.bf16.msra.mxu0 %v983
    %1514 = vmatpush.bf16.msra.mxu0 %v979
    %1515 = vmatpush.bf16.msra.mxu0 %v975
    %1516 = vmatpush.bf16.msra.mxu0 %v971
    %1517 = vmatpush.bf16.msra.mxu0 %v967
    %1518 = vmatpush.bf16.msra.mxu0 %v963
    %1519 = vmatpush.bf16.msra.mxu0 %v959
    %1520 = vmatpush.bf16.msra.mxu0 %v955
    %1521 = vmatmul.bf16.gmra.mxu0 %v271
    %v1522 = vpop.f32.mrf.mxu0
    %v1523 = vadd.f32 %v1510, %v1522
    %v1524 = vpop.f32.mrf.mxu0
    %1525 = vdwg.mxu0
    %1526 = vmatpush.bf16.msra.mxu0 %v1015
    %1527 = vmatpush.bf16.msra.mxu0 %v1011
    %1528 = vmatpush.bf16.msra.mxu0 %v1007
    %1529 = vmatpush.bf16.msra.mxu0 %v1003
    %1530 = vmatpush.bf16.msra.mxu0 %v999
    %1531 = vmatpush.bf16.msra.mxu0 %v995
    %1532 = vmatpush.bf16.msra.mxu0 %v991
    %1533 = vmatpush.bf16.msra.mxu0 %v987
    %1534 = vmatmul.bf16.gmra.mxu0 %v272
    %v1535 = vpop.f32.mrf.mxu0
    %v1536 = vadd.f32 %v1523, %v1535
    %v1537 = vpop.f32.mrf.mxu0
    %1538 = vdwg.mxu0
    %1539 = vmatpush.bf16.msra.mxu0 %v1047
    %1540 = vmatpush.bf16.msra.mxu0 %v1043
    %1541 = vmatpush.bf16.msra.mxu0 %v1039
    %1542 = vmatpush.bf16.msra.mxu0 %v1035
    %1543 = vmatpush.bf16.msra.mxu0 %v1031
    %1544 = vmatpush.bf16.msra.mxu0 %v1027
    %1545 = vmatpush.bf16.msra.mxu0 %v1023
    %1546 = vmatpush.bf16.msra.mxu0 %v1019
    %1547 = vmatmul.bf16.gmra.mxu0 %v273
    %v1548 = vpop.f32.mrf.mxu0
    %v1549 = vadd.f32 %v1536, %v1548
    %v1550 = vpop.f32.mrf.mxu0
    %1551 = vdwg.mxu0
    %v1552 = vadd.f32 %v60, %v1315
    %v1553 = vadd.f32 %v61, %v1393
    %v1554 = vadd.f32 %v62, %v1471
    %v1555 = vadd.f32 %v63, %v1549
    %1556 = vst [vmem:[#allocation2] sm:$0xff] %v1552
    %1557 = vst [vmem:[#allocation2 + $0x8] sm:$0xff] %v1553
    %1558 = vst [vmem:[#allocation2 + $0x10] sm:$0xff] %v1554
    %1559 = vst [vmem:[#allocation2 + $0x18] sm:$0xff] %v1555
    // Predicated region
    $region34: #{_lambda_.1} parent=1 // pred_check
      %p1560 = pneg %p52
    $region35: #{_lambda_.1} parent=1 // pred_check_branch
      %1562 = sbr.rel (%p1560) target = $region37
    $region36: #{_lambda_.1} parent=1 // pred_region
      %v1563 = vld [vmem:[#allocation2] sm:$0xff]
      %v1564 = vld [vmem:[#allocation2 + $0x8] sm:$0xff]
      %v1565 = vld [vmem:[#allocation2 + $0x10] sm:$0xff]
      %v1566 = vld [vmem:[#allocation2 + $0x18] sm:$0xff]
      %v1567 = vld [vmem:[%s2] sm:$0xf]
      %v1569 = vperm.slane %v1567, 0
      %v1570 = vperm.slane %v1567, 1
      %v1571 = vperm.slane %v1567, 2
      %v1572 = vperm.slane %v1567, 3
      %v1577 = vadd.f32 %v1563, %v1569
      %v1578 = vadd.f32 %v1564, %v1570
      %v1579 = vadd.f32 %v1565, %v1571
      %v1580 = vadd.f32 %v1566, %v1572
      %v1581 = vmax.f32 %v1577, 0.0
      %v1582 = vmax.f32 %v1578, 0.0
      %v1583 = vmax.f32 %v1579, 0.0
      %v1584 = vmax.f32 %v1580, 0.0
      %v1585 = vpack.c.bf16 %v1581, %v1581
      %v1586 = vpack.c.bf16 %v1582, %v1582
      %v1587 = vpack.c.bf16 %v1583, %v1583
      %v1588 = vpack.c.bf16 %v1584, %v1584
      %v1589 = vld [vmem:[#allocation5] sm:$0xf]
      %v1590 = vld [vmem:[#allocation5 + $0x4] sm:$0xf]
      %v1591 = vld [vmem:[#allocation5 + $0x8] sm:$0xf]
      %v1592 = vld [vmem:[#allocation5 + $0xc] sm:$0xf]
      %v1593 = vld [vmem:[#allocation5 + $0x10] sm:$0xf]
      %v1594 = vld [vmem:[#allocation5 + $0x14] sm:$0xf]
      %v1595 = vld [vmem:[#allocation5 + $0x18] sm:$0xf]
      %v1596 = vld [vmem:[#allocation5 + $0x1c] sm:$0xf]
      %v1597 = vld [vmem:[#allocation5 + $0x20] sm:$0xf]
      %v1598 = vld [vmem:[#allocation5 + $0x24] sm:$0xf]
      %v1599 = vld [vmem:[#allocation5 + $0x28] sm:$0xf]
      %v1600 = vld [vmem:[#allocation5 + $0x2c] sm:$0xf]
      %v1601 = vld [vmem:[#allocation5 + $0x30] sm:$0xf]
      %v1602 = vld [vmem:[#allocation5 + $0x34] sm:$0xf]
      %v1603 = vld [vmem:[#allocation5 + $0x38] sm:$0xf]
      %v1604 = vld [vmem:[#allocation5 + $0x3c] sm:$0xf]
      %v1605 = vld [vmem:[#allocation5 + $0x40] sm:$0xf]
      %v1606 = vld [vmem:[#allocation5 + $0x44] sm:$0xf]
      %v1607 = vld [vmem:[#allocation5 + $0x48] sm:$0xf]
      %v1608 = vld [vmem:[#allocation5 + $0x4c] sm:$0xf]
      %v1609 = vld [vmem:[#allocation5 + $0x50] sm:$0xf]
      %v1610 = vld [vmem:[#allocation5 + $0x54] sm:$0xf]
      %v1611 = vld [vmem:[#allocation5 + $0x58] sm:$0xf]
      %v1612 = vld [vmem:[#allocation5 + $0x5c] sm:$0xf]
      %v1613 = vld [vmem:[#allocation5 + $0x60] sm:$0xf]
      %v1614 = vld [vmem:[#allocation5 + $0x64] sm:$0xf]
      %v1615 = vld [vmem:[#allocation5 + $0x68] sm:$0xf]
      %v1616 = vld [vmem:[#allocation5 + $0x6c] sm:$0xf]
      %v1617 = vld [vmem:[#allocation5 + $0x70] sm:$0xf]
      %v1618 = vld [vmem:[#allocation5 + $0x74] sm:$0xf]
      %v1619 = vld [vmem:[#allocation5 + $0x78] sm:$0xf]
      %v1620 = vld [vmem:[#allocation5 + $0x7c] sm:$0xf]
      %v1621 = vld [vmem:[#allocation5 + $0x80] sm:$0xf]
      %v1622 = vld [vmem:[#allocation5 + $0x84] sm:$0xf]
      %v1623 = vld [vmem:[#allocation5 + $0x88] sm:$0xf]
      %v1624 = vld [vmem:[#allocation5 + $0x8c] sm:$0xf]
      %v1625 = vld [vmem:[#allocation5 + $0x90] sm:$0xf]
      %v1626 = vld [vmem:[#allocation5 + $0x94] sm:$0xf]
      %v1627 = vld [vmem:[#allocation5 + $0x98] sm:$0xf]
      %v1628 = vld [vmem:[#allocation5 + $0x9c] sm:$0xf]
      %v1629 = vld [vmem:[#allocation5 + $0xa0] sm:$0xf]
      %v1630 = vld [vmem:[#allocation5 + $0xa4] sm:$0xf]
      %v1631 = vld [vmem:[#allocation5 + $0xa8] sm:$0xf]
      %v1632 = vld [vmem:[#allocation5 + $0xac] sm:$0xf]
      %v1633 = vld [vmem:[#allocation5 + $0xb0] sm:$0xf]
      %v1634 = vld [vmem:[#allocation5 + $0xb4] sm:$0xf]
      %v1635 = vld [vmem:[#allocation5 + $0xb8] sm:$0xf]
      %v1636 = vld [vmem:[#allocation5 + $0xbc] sm:$0xf]
      %v1637 = vld [vmem:[#allocation5 + $0xc0] sm:$0xf]
      %v1638 = vld [vmem:[#allocation5 + $0xc4] sm:$0xf]
      %v1639 = vld [vmem:[#allocation5 + $0xc8] sm:$0xf]
      %v1640 = vld [vmem:[#allocation5 + $0xcc] sm:$0xf]
      %v1641 = vld [vmem:[#allocation5 + $0xd0] sm:$0xf]
      %v1642 = vld [vmem:[#allocation5 + $0xd4] sm:$0xf]
      %v1643 = vld [vmem:[#allocation5 + $0xd8] sm:$0xf]
      %v1644 = vld [vmem:[#allocation5 + $0xdc] sm:$0xf]
      %v1645 = vld [vmem:[#allocation5 + $0xe0] sm:$0xf]
      %v1646 = vld [vmem:[#allocation5 + $0xe4] sm:$0xf]
      %v1647 = vld [vmem:[#allocation5 + $0xe8] sm:$0xf]
      %v1648 = vld [vmem:[#allocation5 + $0xec] sm:$0xf]
      %v1649 = vld [vmem:[#allocation5 + $0xf0] sm:$0xf]
      %v1650 = vld [vmem:[#allocation5 + $0xf4] sm:$0xf]
      %v1651 = vld [vmem:[#allocation5 + $0xf8] sm:$0xf]
      %v1652 = vld [vmem:[#allocation5 + $0xfc] sm:$0xf]
      %v1653 = vld [vmem:[%s4] sm:$0x1]
      %v1655 = vperm.slane %v1653, 0
      %v1721 = vunpack.c.l.b16 %v1589
      %v1722 = vunpack.c.l.b16 %v1590
      %v1723 = vunpack.c.l.b16 %v1591
      %v1724 = vunpack.c.l.b16 %v1592
      %v1725 = vunpack.c.l.b16 %v1593
      %v1726 = vunpack.c.l.b16 %v1594
      %v1727 = vunpack.c.l.b16 %v1595
      %v1728 = vunpack.c.l.b16 %v1596
      %v1729 = vunpack.c.l.b16 %v1597
      %v1730 = vunpack.c.l.b16 %v1598
      %v1731 = vunpack.c.l.b16 %v1599
      %v1732 = vunpack.c.l.b16 %v1600
      %v1733 = vunpack.c.l.b16 %v1601
      %v1734 = vunpack.c.l.b16 %v1602
      %v1735 = vunpack.c.l.b16 %v1603
      %v1736 = vunpack.c.l.b16 %v1604
      %v1737 = vunpack.c.l.b16 %v1605
      %v1738 = vunpack.c.l.b16 %v1606
      %v1739 = vunpack.c.l.b16 %v1607
      %v1740 = vunpack.c.l.b16 %v1608
      %v1741 = vunpack.c.l.b16 %v1609
      %v1742 = vunpack.c.l.b16 %v1610
      %v1743 = vunpack.c.l.b16 %v1611
      %v1744 = vunpack.c.l.b16 %v1612
      %v1745 = vunpack.c.l.b16 %v1613
      %v1746 = vunpack.c.l.b16 %v1614
      %v1747 = vunpack.c.l.b16 %v1615
      %v1748 = vunpack.c.l.b16 %v1616
      %v1749 = vunpack.c.l.b16 %v1617
      %v1750 = vunpack.c.l.b16 %v1618
      %v1751 = vunpack.c.l.b16 %v1619
      %v1752 = vunpack.c.l.b16 %v1620
      %v1753 = vunpack.c.l.b16 %v1621
      %v1754 = vunpack.c.l.b16 %v1622
      %v1755 = vunpack.c.l.b16 %v1623
      %v1756 = vunpack.c.l.b16 %v1624
      %v1757 = vunpack.c.l.b16 %v1625
      %v1758 = vunpack.c.l.b16 %v1626
      %v1759 = vunpack.c.l.b16 %v1627
      %v1760 = vunpack.c.l.b16 %v1628
      %v1761 = vunpack.c.l.b16 %v1629
      %v1762 = vunpack.c.l.b16 %v1630
      %v1763 = vunpack.c.l.b16 %v1631
      %v1764 = vunpack.c.l.b16 %v1632
      %v1765 = vunpack.c.l.b16 %v1633
      %v1766 = vunpack.c.l.b16 %v1634
      %v1767 = vunpack.c.l.b16 %v1635
      %v1768 = vunpack.c.l.b16 %v1636
      %v1769 = vunpack.c.l.b16 %v1637
      %v1770 = vunpack.c.l.b16 %v1638
      %v1771 = vunpack.c.l.b16 %v1639
      %v1772 = vunpack.c.l.b16 %v1640
      %v1773 = vunpack.c.l.b16 %v1641
      %v1774 = vunpack.c.l.b16 %v1642
      %v1775 = vunpack.c.l.b16 %v1643
      %v1776 = vunpack.c.l.b16 %v1644
      %v1777 = vunpack.c.l.b16 %v1645
      %v1778 = vunpack.c.l.b16 %v1646
      %v1779 = vunpack.c.l.b16 %v1647
      %v1780 = vunpack.c.l.b16 %v1648
      %v1781 = vunpack.c.l.b16 %v1649
      %v1782 = vunpack.c.l.b16 %v1650
      %v1783 = vunpack.c.l.b16 %v1651
      %v1784 = vunpack.c.l.b16 %v1652
      %v1785 = vpack.c.b16 %v1722, %v1721
      %v1786 = vpack.c.b16 %v1724, %v1723
      %v1787 = vpack.c.b16 %v1726, %v1725
      %v1788 = vpack.c.b16 %v1728, %v1727
      %v1789 = vpack.c.b16 %v1730, %v1729
      %v1790 = vpack.c.b16 %v1732, %v1731
      %v1791 = vpack.c.b16 %v1734, %v1733
      %v1792 = vpack.c.b16 %v1736, %v1735
      %v1793 = vpack.c.b16 %v1738, %v1737
      %v1794 = vpack.c.b16 %v1740, %v1739
      %v1795 = vpack.c.b16 %v1742, %v1741
      %v1796 = vpack.c.b16 %v1744, %v1743
      %v1797 = vpack.c.b16 %v1746, %v1745
      %v1798 = vpack.c.b16 %v1748, %v1747
      %v1799 = vpack.c.b16 %v1750, %v1749
      %v1800 = vpack.c.b16 %v1752, %v1751
      %v1801 = vpack.c.b16 %v1754, %v1753
      %v1802 = vpack.c.b16 %v1756, %v1755
      %v1803 = vpack.c.b16 %v1758, %v1757
      %v1804 = vpack.c.b16 %v1760, %v1759
      %v1805 = vpack.c.b16 %v1762, %v1761
      %v1806 = vpack.c.b16 %v1764, %v1763
      %v1807 = vpack.c.b16 %v1766, %v1765
      %v1808 = vpack.c.b16 %v1768, %v1767
      %v1809 = vpack.c.b16 %v1770, %v1769
      %v1810 = vpack.c.b16 %v1772, %v1771
      %v1811 = vpack.c.b16 %v1774, %v1773
      %v1812 = vpack.c.b16 %v1776, %v1775
      %v1813 = vpack.c.b16 %v1778, %v1777
      %v1814 = vpack.c.b16 %v1780, %v1779
      %v1815 = vpack.c.b16 %v1782, %v1781
      %v1816 = vpack.c.b16 %v1784, %v1783
      %1849 = vmatpush.bf16.msra.mxu0 %v1792
      %1850 = vmatpush.bf16.msra.mxu0 %v1791
      %1851 = vmatpush.bf16.msra.mxu0 %v1790
      %1852 = vmatpush.bf16.msra.mxu0 %v1789
      %1853 = vmatpush.bf16.msra.mxu0 %v1788
      %1854 = vmatpush.bf16.msra.mxu0 %v1787
      %1855 = vmatpush.bf16.msra.mxu0 %v1786
      %1856 = vmatpush.bf16.msra.mxu0 %v1785
      %1857 = vmatmul.bf16.gmra.mxu0 %v1585
      %v1858 = vpop.f32.mrf.mxu0
      %v1859 = vadd.f32 %v1655, %v1858
      %v1860 = vpop.f32.mrf.mxu0
      %1861 = vdwg.mxu0
      %1862 = vmatpush.bf16.msra.mxu0 %v1800
      %1863 = vmatpush.bf16.msra.mxu0 %v1799
      %1864 = vmatpush.bf16.msra.mxu0 %v1798
      %1865 = vmatpush.bf16.msra.mxu0 %v1797
      %1866 = vmatpush.bf16.msra.mxu0 %v1796
      %1867 = vmatpush.bf16.msra.mxu0 %v1795
      %1868 = vmatpush.bf16.msra.mxu0 %v1794
      %1869 = vmatpush.bf16.msra.mxu0 %v1793
      %1870 = vmatmul.bf16.gmra.mxu0 %v1586
      %v1871 = vpop.f32.mrf.mxu0
      %v1872 = vadd.f32 %v1859, %v1871
      %v1873 = vpop.f32.mrf.mxu0
      %1874 = vdwg.mxu0
      %1875 = vmatpush.bf16.msra.mxu0 %v1808
      %1876 = vmatpush.bf16.msra.mxu0 %v1807
      %1877 = vmatpush.bf16.msra.mxu0 %v1806
      %1878 = vmatpush.bf16.msra.mxu0 %v1805
      %1879 = vmatpush.bf16.msra.mxu0 %v1804
      %1880 = vmatpush.bf16.msra.mxu0 %v1803
      %1881 = vmatpush.bf16.msra.mxu0 %v1802
      %1882 = vmatpush.bf16.msra.mxu0 %v1801
      %1883 = vmatmul.bf16.gmra.mxu0 %v1587
      %v1884 = vpop.f32.mrf.mxu0
      %v1885 = vadd.f32 %v1872, %v1884
      %v1886 = vpop.f32.mrf.mxu0
      %1887 = vdwg.mxu0
      %1888 = vmatpush.bf16.msra.mxu0 %v1816
      %1889 = vmatpush.bf16.msra.mxu0 %v1815
      %1890 = vmatpush.bf16.msra.mxu0 %v1814
      %1891 = vmatpush.bf16.msra.mxu0 %v1813
      %1892 = vmatpush.bf16.msra.mxu0 %v1812
      %1893 = vmatpush.bf16.msra.mxu0 %v1811
      %1894 = vmatpush.bf16.msra.mxu0 %v1810
      %1895 = vmatpush.bf16.msra.mxu0 %v1809
      %1896 = vmatmul.bf16.gmra.mxu0 %v1588
      %v1897 = vpop.f32.mrf.mxu0
      %v1898 = vadd.f32 %v1885, %v1897
      %v1899 = vpop.f32.mrf.mxu0
      %1900 = vdwg.mxu0
      %v1901 = vmul.f32 %v1898, %v1898
      %1902 = vadd.xlane.f32.xlu0 %v1901
      %v1903 = vpop.xlane.xlu0 %1902
      %v1904 = vmax.f32 %v1903, 1e-24
      %v1905 = vrsqrt.pop %v1904
      %v1906 = vmul.f32 %v1905, %v1904
      %v1907 = vmul.f32 %v1906, %v1905
      %v1908 = vmul.f32 0.5, %v1907
      %v1909 = vsub.f32 1.5, %v1908
      %v1910 = vmul.f32 %v1905, %v1909
      %vm1911 = vweird.f32 %v1904
      %vm1912 = vweird.f32 %v1905
      %vm1913 = vmor %vm1911, %vm1912
      %v1914 = vsel %vm1913, %v1905, %v1910
      %v1915 = vmul.f32 %v1898, %v1914
      %1916 = vst [vmem:[%s5] sm:$0xff] %v1915
    $region37: #{_lambda_.1} parent=1 // pred_fallthru
      _
    // Predicated region
    $region38: #{_lambda_.1} parent=1 // pred_check
      _
    $region39: #{_lambda_.1} parent=1 // pred_check_branch
      %1918 = sbr.rel (0) target = $region41
    $region40: #{_lambda_.1} parent=1 // pred_region
      _
    $region41: #{_lambda_.1} parent=1 // pred_fallthru
      _
    // Predicated region
    $region42: #{_lambda_.1} parent=1 // pred_check
      _
    $region43: #{_lambda_.1} parent=1 // pred_check_branch
      %1920 = sbr.rel (0) target = $region45
    $region44: #{_lambda_.1} parent=1 // pred_region
      _
    $region45: #{_lambda_.1} parent=1 // pred_fallthru
      _
    %1921 = vsyncpa [#allocation4], 1
    %1922 = vsyncpa [#allocation6], 1

</llo_original>
